<compile_context>
chip_gen: v7x
topology: tpu7x:2x2x1
jax: 0.10.0
libtpu: 0.0.40
codegen_flags: <defaults>
</compile_context>

<pallas_src>
import functools

import jax
import jax.numpy as jnp
from jax import lax
from jax.experimental import pallas as pl
from jax.experimental.pallas import tpu as pltpu


# ----------------------------------------------------------------------------
# helpers (pure jnp, usable both inside the kernel and in the reference)
# ----------------------------------------------------------------------------
def _layernorm(x, g, b, eps):
    mu = jnp.mean(x, axis=-1, keepdims=True)
    var = jnp.mean(jnp.square(x - mu), axis=-1, keepdims=True)
    return (x - mu) * lax.rsqrt(var + eps) * g + b


# ----------------------------------------------------------------------------
# Fused all-layers kernel: grid=(depth,), activations resident in VMEM scratch
# ----------------------------------------------------------------------------
def saint_col_layers_kernel(
    x_ref, ln1_g_ref, ln1_b_ref, w_qkv_ref, w_out_ref, b_out_ref,
    ln2_g_ref, ln2_b_ref, w_ff1_ref, b_ff1_ref, w_ff2_ref, b_ff2_ref,
    o_ref, act_ref, *, heads, dim_head, eps,
):
    layer = pl.program_id(0)

    # Load the input once; activations then live in VMEM for all layers.
    @pl.when(layer == 0)
    def _():
        act_ref[...] = x_ref[...].astype(jnp.float32)

    x = act_ref[...]                                           # (S, D) f32

    # ---- PreNorm 1 + intersample attention ---------------------------------
    xn = _layernorm(x, ln1_g_ref[...], ln1_b_ref[...], eps)
    # bf16 operands / f32 accumulation on the MXU. Softmax scale is already
    # folded into the Q columns of w_qkv (done on host).
    qkv = jnp.dot(xn.astype(jnp.bfloat16), w_qkv_ref[...],
                  preferred_element_type=jnp.float32)          # (S, 3*inner)
    inner = heads * dim_head
    q = qkv[:, :inner]
    k = qkv[:, inner:2 * inner]
    v = qkv[:, 2 * inner:]

    # Per-head attention. heads is small (4) so a static unroll is fine here;
    # the out-projection is fused into ONE inner-deep matmul below.
    head_outs = []
    for h in range(heads):
        sl = slice(h * dim_head, (h + 1) * dim_head)
        qh = q[:, sl].astype(jnp.bfloat16)
        kh = k[:, sl].astype(jnp.bfloat16)
        vh = v[:, sl].astype(jnp.bfloat16)
        # q @ k^T without materializing a transpose: contract Dh of both.
        sim = lax.dot_general(qh, kh, (((1,), (1,)), ((), ())),
                              preferred_element_type=jnp.float32)   # (S, S)
        sim = sim - jnp.max(sim, axis=-1, keepdims=True)
        p = jnp.exp(sim)                                            # f32 softmax
        attn = p * pl.reciprocal(jnp.sum(p, axis=-1, keepdims=True), approx=True)
        head_outs.append(jnp.dot(attn.astype(jnp.bfloat16), vh,
                                 preferred_element_type=jnp.float32))
    # Lane-packed (S, inner) slab -> single fused 256-deep out-projection.
    o_heads = jnp.concatenate(head_outs, axis=-1)
    attn_out = jnp.dot(o_heads.astype(jnp.bfloat16), w_out_ref[...],
                       preferred_element_type=jnp.float32)          # (S, D)
    # PreNorm(Residual(Attention)): the residual adds the *normalized* input.
    x1 = attn_out + b_out_ref[...] + xn

    # ---- PreNorm 2 + GEGLU FeedForward --------------------------------------
    xn2 = _layernorm(x1, ln2_g_ref[...], ln2_b_ref[...], eps)
    hcat = jnp.dot(xn2.astype(jnp.bfloat16), w_ff1_ref[...],
                   preferred_element_type=jnp.float32) + b_ff1_ref[...]
    hidden = w_ff2_ref.shape[0]
    a = hcat[:, :hidden]
    gates = hcat[:, hidden:]
    gg = a * jax.nn.gelu(gates)            # tanh-approx GELU (f32)
    x2 = (jnp.dot(gg.astype(jnp.bfloat16), w_ff2_ref[...],
                  preferred_element_type=jnp.float32)
          + b_ff2_ref[...] + xn2)

    act_ref[...] = x2                      # stays resident for the next layer

    @pl.when(layer == pl.num_programs(0) - 1)
    def _():
        o_ref[...] = x2.astype(o_ref.dtype)


# ----------------------------------------------------------------------------
# Host-side parameter packing: stack depth axis, bf16 weights, fold scale
# ----------------------------------------------------------------------------
def _stack_layer_params(layer_params, *, heads, dim_head):
    inner = heads * dim_head
    scale = float(dim_head) ** -0.5
    stacked = [jnp.stack(p) for p in zip(*layer_params)]
    g1, b1, w_qkv, w_out, b_out, g2, b2, w_ff1, b_ff1, w_ff2, b_ff2 = stacked
    # Matmul weights -> bf16; fold the softmax scale into the Q columns.
    w_qkv = w_qkv.astype(jnp.float32)
    w_qkv = w_qkv.at[:, :, :inner].multiply(scale)
    w_qkv = w_qkv.astype(jnp.bfloat16)
    w_out = w_out.astype(jnp.bfloat16)
    w_ff1 = w_ff1.astype(jnp.bfloat16)
    w_ff2 = w_ff2.astype(jnp.bfloat16)
    f32 = lambda a: a.astype(jnp.float32)
    return (f32(g1), f32(b1), w_qkv, w_out, f32(b_out), f32(g2), f32(b2),
            w_ff1, f32(b_ff1), w_ff2, f32(b_ff2))


# ----------------------------------------------------------------------------
# Full RowColTransformer (style='col') forward
# ----------------------------------------------------------------------------
def rowcol_transformer_forward(x, x_cont, image_feature, layer_params,
                               *, heads, dim_head=64, eps=1e-5):
    xc = jnp.concatenate([x, x_cont, image_feature], axis=1)     # (B, n, dim)
    B, n, d = xc.shape
    S, D = B, n * d
    xf = xc.reshape(S, D).astype(jnp.float32)   # 'b n d -> 1 b (n d)', leading 1 dropped

    depth = len(layer_params)
    params = _stack_layer_params(layer_params, heads=heads, dim_head=dim_head)
    inner = heads * dim_head
    hidden = params[9].shape[1]                 # w_ff2: (depth, hidden, D)

    kern = functools.partial(saint_col_layers_kernel,
                             heads=heads, dim_head=dim_head, eps=eps)

    def layer_spec(a):  # one layer slab per grid step, auto double-buffered
        return pl.BlockSpec((None,) + a.shape[1:], lambda l: (l, 0, 0))

    x_spec = pl.BlockSpec((S, D), lambda l: (0, 0))     # fetched once (constant index)
    out_spec = pl.BlockSpec((S, D), lambda l: (0, 0))   # written back once at grid end
    in_specs = [x_spec] + [layer_spec(p) for p in params]

    # Rough VMEM / cost accounting for the compiler.
    weight_bytes = sum(int(p.nbytes) for p in params)
    weight_bytes_layer = weight_bytes // depth
    working_bytes = (6 * S * D * 4 + S * 3 * inner * 4 + S * 2 * hidden * 4
                     + heads * S * S * 4)
    vmem_limit = int(min(100 * 1024 * 1024,
                         max(32 * 1024 * 1024,
                             2 * weight_bytes_layer + 4 * working_bytes)))
    flops_layer = (2 * S * D * 3 * inner + heads * 4 * S * S * dim_head
                   + 2 * S * inner * D + 2 * S * D * 2 * hidden
                   + 2 * S * hidden * D)
    cost = pl.CostEstimate(flops=depth * flops_layer,
                           transcendentals=depth * (heads * S * S + S * hidden),
                           bytes_accessed=weight_bytes + 2 * S * D * 4)

    fn = pl.pallas_call(
        kern,
        out_shape=jax.ShapeDtypeStruct((S, D), jnp.float32),
        grid_spec=pltpu.PrefetchScalarGridSpec(
            num_scalar_prefetch=0,
            grid=(depth,),
            in_specs=in_specs,
            out_specs=out_spec,
            scratch_shapes=[pltpu.VMEM((S, D), jnp.float32)]),
        compiler_params=pltpu.CompilerParams(
            dimension_semantics=("arbitrary",),
            vmem_limit_bytes=vmem_limit),
        cost_estimate=cost,
    )
    yf = fn(xf, *params)
    return yf.reshape(B, n, d)      # rearrange '1 b (n d) -> b n d'


# ----------------------------------------------------------------------------
# Pure-JAX reference mirroring the PyTorch forward (col style), f32 math
# ----------------------------------------------------------------------------
def rowcol_transformer_reference(x, x_cont, image_feature, layer_params,
                                 *, heads, dim_head=64, eps=1e-5):
    xc = jnp.concatenate([x, x_cont, image_feature], axis=1)
    B, n, d = xc.shape
    xf = xc.reshape(B, n * d).astype(jnp.float32)
    scale = float(dim_head) ** -0.5
    inner = heads * dim_head
    for (g1, b1, w_qkv, w_out, b_out, g2, b2, w1, bb1, w2, bb2) in layer_params:
        w_qkv, w_out, w1, w2 = (w.astype(jnp.float32) for w in (w_qkv, w_out, w1, w2))
        xn = _layernorm(xf, g1, b1, eps)
        qkv = xn @ w_qkv
        q, k, v = jnp.split(qkv, 3, axis=-1)
        q = q.reshape(B, heads, dim_head).transpose(1, 0, 2)
        k = k.reshape(B, heads, dim_head).transpose(1, 0, 2)
        v = v.reshape(B, heads, dim_head).transpose(1, 0, 2)
        sim = jnp.einsum("hid,hjd->hij", q, k) * scale
        attn = jax.nn.softmax(sim, axis=-1)
        out = jnp.einsum("hij,hjd->hid", attn, v)
        out = out.transpose(1, 0, 2).reshape(B, inner)
        xf = out @ w_out + b_out + xn
        xn2 = _layernorm(xf, g2, b2, eps)
        hcat = xn2 @ w1 + bb1
        a, gates = jnp.split(hcat, 2, axis=-1)
        xf = (a * jax.nn.gelu(gates)) @ w2 + bb2 + xn2
    return xf.reshape(B, n, d)


# ----------------------------------------------------------------------------
# Deterministic parameter construction (matmul weights stored in bf16)
# ----------------------------------------------------------------------------
def init_layer_params(key, d4, heads, dim_head, mult=4):
    inner = heads * dim_head
    hidden = d4 * mult
    ks = jax.random.split(key, 11)
    bf16 = lambda a: a.astype(jnp.bfloat16)
    g1 = 1.0 + 0.05 * jax.random.normal(ks[0], (1, d4), jnp.float32)
    b1 = 0.05 * jax.random.normal(ks[1], (1, d4), jnp.float32)
    w_qkv = bf16(0.05 * jax.random.normal(ks[2], (d4, 3 * inner), jnp.float32))
    w_out = bf16(0.05 * jax.random.normal(ks[3], (inner, d4), jnp.float32))
    b_out = 0.05 * jax.random.normal(ks[4], (1, d4), jnp.float32)
    g2 = 1.0 + 0.05 * jax.random.normal(ks[5], (1, d4), jnp.float32)
    b2 = 0.05 * jax.random.normal(ks[6], (1, d4), jnp.float32)
    w_ff1 = bf16(0.05 * jax.random.normal(ks[7], (d4, 2 * hidden), jnp.float32))
    b_ff1 = 0.05 * jax.random.normal(ks[8], (1, 2 * hidden), jnp.float32)
    w_ff2 = bf16(0.05 * jax.random.normal(ks[9], (hidden, d4), jnp.float32))
    b_ff2 = 0.05 * jax.random.normal(ks[10], (1, d4), jnp.float32)
    return (g1, b1, w_qkv, w_out, b_out, g2, b2, w_ff1, b_ff1, w_ff2, b_ff2)


if __name__ == "__main__":
    # RowColTransformer hard-codes nfeats=4, so the total sequence length after
    # the two concats must be 4 for the 'col'-style shapes to be consistent.
    B = 8                  # batch; becomes the intersample-attention seq length
    dim = 32               # per-token feature dim
    n_cat, n_cont, n_img = 2, 1, 1          # 2 + 1 + 1 = 4 = nfeats
    depth = 3
    heads = 4
    dim_head = 64                            # hard-coded in the 'col' attention
    d4 = (n_cat + n_cont + n_img) * dim      # = dim * nfeats = 128 (lane-dense)

    key = jax.random.PRNGKey(0)
    kx, kc, ki, kp = jax.random.split(key, 4)
    x = jax.random.normal(kx, (B, n_cat, dim), jnp.float32)
    x_cont = jax.random.normal(kc, (B, n_cont, dim), jnp.float32)
    image_feature = jax.random.normal(ki, (B, n_img, dim), jnp.float32)

    layer_keys = jax.random.split(kp, depth)
    layer_params = [init_layer_params(k, d4, heads, dim_head) for k in layer_keys]

    y = rowcol_transformer_forward(x, x_cont, image_feature, layer_params,
                                   heads=heads, dim_head=dim_head)
    y = jax.block_until_ready(y)

    y_ref = rowcol_transformer_reference(x, x_cont, image_feature, layer_params,
                                         heads=heads, dim_head=dim_head)
    assert y.shape == (B, n_cat + n_cont + n_img, dim)
    max_err = float(jnp.max(jnp.abs(y - y_ref)))
    # bf16 matmul operands (f32 accumulation) vs f32 reference -> ~1e-2 budget.
    assert jnp.allclose(y, y_ref, atol=2e-2, rtol=2e-2), f"mismatch, max err {max_err}"

    print("KERNEL_OK")
</pallas_src>

<mosaic_0001>
module attributes {stable_mosaic.version = 11 : i64} {
  func.func @saint_col_layers_kernel(%arg0: i32, %arg1: memref<8x128xf32, #tpu.memory_space<vmem>>, %arg2: memref<1x1x128xf32, #tpu.memory_space<vmem>>, %arg3: memref<1x1x128xf32, #tpu.memory_space<vmem>>, %arg4: memref<1x128x768xbf16, #tpu.memory_space<vmem>>, %arg5: memref<1x256x128xbf16, #tpu.memory_space<vmem>>, %arg6: memref<1x1x128xf32, #tpu.memory_space<vmem>>, %arg7: memref<1x1x128xf32, #tpu.memory_space<vmem>>, %arg8: memref<1x1x128xf32, #tpu.memory_space<vmem>>, %arg9: memref<1x128x1024xbf16, #tpu.memory_space<vmem>>, %arg10: memref<1x1x1024xf32, #tpu.memory_space<vmem>>, %arg11: memref<1x512x128xbf16, #tpu.memory_space<vmem>>, %arg12: memref<1x1x128xf32, #tpu.memory_space<vmem>>, %arg13: memref<8x128xf32, #tpu.memory_space<vmem>>, %arg14: memref<8x128xf32, #tpu.memory_space<vmem>>) attributes {dimension_semantics = [#tpu.dimension_semantics<arbitrary>], iteration_bounds = array<i64: 3>, scalar_prefetch = 0 : i64, scratch_operands = 1 : i64, tpu.core_type = #tpu.core_type<tc>, window_params = [{pipeline_mode = #tpu.pipeline_mode<synchronous>, transform_indices = @transform_0, window_bounds = array<i64: 8, 128>}, {transform_indices = @transform_1, window_bounds = array<i64: 1, 1, 128>}, {transform_indices = @transform_2, window_bounds = array<i64: 1, 1, 128>}, {transform_indices = @transform_3, window_bounds = array<i64: 1, 128, 768>}, {transform_indices = @transform_4, window_bounds = array<i64: 1, 256, 128>}, {transform_indices = @transform_5, window_bounds = array<i64: 1, 1, 128>}, {transform_indices = @transform_6, window_bounds = array<i64: 1, 1, 128>}, {transform_indices = @transform_7, window_bounds = array<i64: 1, 1, 128>}, {transform_indices = @transform_8, window_bounds = array<i64: 1, 128, 1024>}, {transform_indices = @transform_9, window_bounds = array<i64: 1, 1, 1024>}, {transform_indices = @transform_10, window_bounds = array<i64: 1, 512, 128>}, {transform_indices = @transform_11, window_bounds = array<i64: 1, 1, 128>}, {pipeline_mode = #tpu.pipeline_mode<synchronous>, transform_indices = @transform_12, window_bounds = array<i64: 8, 128>}]} {
    %c0_i32 = arith.constant 0 : i32
    %0 = arith.cmpi eq, %arg0, %c0_i32 : i32
    %1 = arith.extui %0 : i1 to i32
    %c0_i32_0 = arith.constant 0 : i32
    %2 = arith.cmpi ne, %1, %c0_i32_0 : i32
    scf.if %2 {
      %c0_71 = arith.constant 0 : index
      %c0_72 = arith.constant 0 : index
      %186 = vector.load %arg1[%c0_71, %c0_72] : memref<8x128xf32, #tpu.memory_space<vmem>>, vector<8x128xf32>
      %c0_73 = arith.constant 0 : index
      %c0_74 = arith.constant 0 : index
      %187 = vector.load %arg14[%c0_73, %c0_74] : memref<8x128xf32, #tpu.memory_space<vmem>>, vector<8x128xf32>
      tpu.vector_store %arg14[%c0_73, %c0_74], %186 {strides = array<i32>} : memref<8x128xf32, #tpu.memory_space<vmem>>, vector<8x128xf32>,
    } else {
    }
    %c0 = arith.constant 0 : index
    %c0_1 = arith.constant 0 : index
    %3 = vector.load %arg14[%c0, %c0_1] : memref<8x128xf32, #tpu.memory_space<vmem>>, vector<8x128xf32>
    %c0_2 = arith.constant 0 : index
    %c0_3 = arith.constant 0 : index
    %c0_4 = arith.constant 0 : index
    %4 = vector.load %arg2[%c0_2, %c0_3, %c0_4] : memref<1x1x128xf32, #tpu.memory_space<vmem>>, vector<1x1x128xf32>
    %5 = vector.shape_cast %4 : vector<1x1x128xf32> to vector<1x128xf32>
    %c0_5 = arith.constant 0 : index
    %c0_6 = arith.constant 0 : index
    %c0_7 = arith.constant 0 : index
    %6 = vector.load %arg3[%c0_5, %c0_6, %c0_7] : memref<1x1x128xf32, #tpu.memory_space<vmem>>, vector<1x1x128xf32>
    %7 = vector.shape_cast %6 : vector<1x1x128xf32> to vector<1x128xf32>
    %cst = arith.constant dense<0.000000e+00> : vector<8xf32>
    %8 = vector.multi_reduction <add>, %3, %cst [1] : vector<8x128xf32> to vector<8xf32>
    %9 = vector.shape_cast %8 : vector<8xf32> to vector<8x1xf32>
    %cst_8 = arith.constant 1.280000e+02 : f32
    %10 = vector.broadcast %cst_8 : f32 to vector<8x1xf32>
    %11 = arith.divf %9, %10 : vector<8x1xf32>
    %12 = vector.broadcast %11 : vector<8x1xf32> to vector<8x128xf32>
    %13 = arith.subf %3, %12 : vector<8x128xf32>
    %14 = arith.mulf %13, %13 : vector<8x128xf32>
    %cst_9 = arith.constant dense<0.000000e+00> : vector<8xf32>
    %15 = vector.multi_reduction <add>, %14, %cst_9 [1] : vector<8x128xf32> to vector<8xf32>
    %16 = vector.shape_cast %15 : vector<8xf32> to vector<8x1xf32>
    %cst_10 = arith.constant 1.280000e+02 : f32
    %17 = vector.broadcast %cst_10 : f32 to vector<8x1xf32>
    %18 = arith.divf %16, %17 : vector<8x1xf32>
    %19 = vector.broadcast %11 : vector<8x1xf32> to vector<8x128xf32>
    %20 = arith.subf %3, %19 : vector<8x128xf32>
    %cst_11 = arith.constant 9.99999974E-6 : f32
    %21 = vector.broadcast %cst_11 : f32 to vector<8x1xf32>
    %22 = arith.addf %18, %21 : vector<8x1xf32>
    %23 = math.rsqrt %22 : vector<8x1xf32>
    %24 = vector.broadcast %23 : vector<8x1xf32> to vector<8x128xf32>
    %25 = arith.mulf %20, %24 : vector<8x128xf32>
    %26 = vector.broadcast %5 : vector<1x128xf32> to vector<8x128xf32>
    %27 = arith.mulf %25, %26 : vector<8x128xf32>
    %28 = vector.broadcast %7 : vector<1x128xf32> to vector<8x128xf32>
    %29 = arith.addf %27, %28 : vector<8x128xf32>
    %30 = arith.truncf %29 : vector<8x128xf32> to vector<8x128xbf16>
    %c0_12 = arith.constant 0 : index
    %c0_13 = arith.constant 0 : index
    %c0_14 = arith.constant 0 : index
    %31 = vector.load %arg4[%c0_12, %c0_13, %c0_14] : memref<1x128x768xbf16, #tpu.memory_space<vmem>>, vector<1x128x768xbf16>
    %32 = vector.shape_cast %31 : vector<1x128x768xbf16> to vector<128x768xbf16>
    %cst_15 = arith.constant dense<0.000000e+00> : vector<8x768xf32>
    %33 = tpu.matmul %30, %32, %cst_15 {dimension_numbers = #tpu.dot_dimension_numbers<[1], [0], [0], [1], [0, 0, 1, 1], [], []>} : vector<8x128xbf16>, vector<128x768xbf16>, vector<8x768xf32> -> vector<8x768xf32>
    %34 = vector.extract_strided_slice %33 {offsets = [0, 0], sizes = [8, 256], strides = [1, 1]} : vector<8x768xf32> to vector<8x256xf32>
    %35 = vector.extract_strided_slice %33 {offsets = [0, 256], sizes = [8, 256], strides = [1, 1]} : vector<8x768xf32> to vector<8x256xf32>
    %36 = vector.extract_strided_slice %33 {offsets = [0, 512], sizes = [8, 256], strides = [1, 1]} : vector<8x768xf32> to vector<8x256xf32>
    %37 = vector.extract_strided_slice %34 {offsets = [0, 0], sizes = [8, 64], strides = [1, 1]} : vector<8x256xf32> to vector<8x64xf32>
    %38 = arith.truncf %37 : vector<8x64xf32> to vector<8x64xbf16>
    %39 = vector.extract_strided_slice %35 {offsets = [0, 0], sizes = [8, 64], strides = [1, 1]} : vector<8x256xf32> to vector<8x64xf32>
    %40 = arith.truncf %39 : vector<8x64xf32> to vector<8x64xbf16>
    %41 = vector.extract_strided_slice %36 {offsets = [0, 0], sizes = [8, 64], strides = [1, 1]} : vector<8x256xf32> to vector<8x64xf32>
    %42 = arith.truncf %41 : vector<8x64xf32> to vector<8x64xbf16>
    %cst_16 = arith.constant dense<0.000000e+00> : vector<8x8xf32>
    %43 = tpu.matmul %38, %40, %cst_16 {dimension_numbers = #tpu.dot_dimension_numbers<[1], [1], [0], [0], [0, 0, 1, 0], [], []>} : vector<8x64xbf16>, vector<8x64xbf16>, vector<8x8xf32> -> vector<8x8xf32>
    %cst_17 = arith.constant dense<0xFF800000> : vector<8xf32>
    %44 = vector.multi_reduction <maximumf>, %43, %cst_17 [1] : vector<8x8xf32> to vector<8xf32>
    %45 = vector.shape_cast %44 : vector<8xf32> to vector<8x1xf32>
    %46 = vector.broadcast %45 : vector<8x1xf32> to vector<8x8xf32>
    %47 = arith.subf %43, %46 : vector<8x8xf32>
    %48 = math.exp %47 : vector<8x8xf32>
    %cst_18 = arith.constant dense<0.000000e+00> : vector<8xf32>
    %49 = vector.multi_reduction <add>, %48, %cst_18 [1] : vector<8x8xf32> to vector<8xf32>
    %50 = vector.shape_cast %49 : vector<8xf32> to vector<8x1xf32>
    %51 = tpu.reciprocal %50 {approx = true} : vector<8x1xf32> -> vector<8x1xf32>
    %52 = vector.broadcast %51 : vector<8x1xf32> to vector<8x8xf32>
    %53 = arith.mulf %48, %52 : vector<8x8xf32>
    %54 = arith.truncf %53 : vector<8x8xf32> to vector<8x8xbf16>
    %cst_19 = arith.constant dense<0.000000e+00> : vector<8x64xf32>
    %55 = tpu.matmul %54, %42, %cst_19 {dimension_numbers = #tpu.dot_dimension_numbers<[1], [0], [0], [1], [0, 0, 1, 1], [], []>} : vector<8x8xbf16>, vector<8x64xbf16>, vector<8x64xf32> -> vector<8x64xf32>
    %56 = vector.extract_strided_slice %34 {offsets = [0, 64], sizes = [8, 64], strides = [1, 1]} : vector<8x256xf32> to vector<8x64xf32>
    %57 = arith.truncf %56 : vector<8x64xf32> to vector<8x64xbf16>
    %58 = vector.extract_strided_slice %35 {offsets = [0, 64], sizes = [8, 64], strides = [1, 1]} : vector<8x256xf32> to vector<8x64xf32>
    %59 = arith.truncf %58 : vector<8x64xf32> to vector<8x64xbf16>
    %60 = vector.extract_strided_slice %36 {offsets = [0, 64], sizes = [8, 64], strides = [1, 1]} : vector<8x256xf32> to vector<8x64xf32>
    %61 = arith.truncf %60 : vector<8x64xf32> to vector<8x64xbf16>
    %cst_20 = arith.constant dense<0.000000e+00> : vector<8x8xf32>
    %62 = tpu.matmul %57, %59, %cst_20 {dimension_numbers = #tpu.dot_dimension_numbers<[1], [1], [0], [0], [0, 0, 1, 0], [], []>} : vector<8x64xbf16>, vector<8x64xbf16>, vector<8x8xf32> -> vector<8x8xf32>
    %cst_21 = arith.constant dense<0xFF800000> : vector<8xf32>
    %63 = vector.multi_reduction <maximumf>, %62, %cst_21 [1] : vector<8x8xf32> to vector<8xf32>
    %64 = vector.shape_cast %63 : vector<8xf32> to vector<8x1xf32>
    %65 = vector.broadcast %64 : vector<8x1xf32> to vector<8x8xf32>
    %66 = arith.subf %62, %65 : vector<8x8xf32>
    %67 = math.exp %66 : vector<8x8xf32>
    %cst_22 = arith.constant dense<0.000000e+00> : vector<8xf32>
    %68 = vector.multi_reduction <add>, %67, %cst_22 [1] : vector<8x8xf32> to vector<8xf32>
    %69 = vector.shape_cast %68 : vector<8xf32> to vector<8x1xf32>
    %70 = tpu.reciprocal %69 {approx = true} : vector<8x1xf32> -> vector<8x1xf32>
    %71 = vector.broadcast %70 : vector<8x1xf32> to vector<8x8xf32>
    %72 = arith.mulf %67, %71 : vector<8x8xf32>
    %73 = arith.truncf %72 : vector<8x8xf32> to vector<8x8xbf16>
    %cst_23 = arith.constant dense<0.000000e+00> : vector<8x64xf32>
    %74 = tpu.matmul %73, %61, %cst_23 {dimension_numbers = #tpu.dot_dimension_numbers<[1], [0], [0], [1], [0, 0, 1, 1], [], []>} : vector<8x8xbf16>, vector<8x64xbf16>, vector<8x64xf32> -> vector<8x64xf32>
    %75 = vector.extract_strided_slice %34 {offsets = [0, 128], sizes = [8, 64], strides = [1, 1]} : vector<8x256xf32> to vector<8x64xf32>
    %76 = arith.truncf %75 : vector<8x64xf32> to vector<8x64xbf16>
    %77 = vector.extract_strided_slice %35 {offsets = [0, 128], sizes = [8, 64], strides = [1, 1]} : vector<8x256xf32> to vector<8x64xf32>
    %78 = arith.truncf %77 : vector<8x64xf32> to vector<8x64xbf16>
    %79 = vector.extract_strided_slice %36 {offsets = [0, 128], sizes = [8, 64], strides = [1, 1]} : vector<8x256xf32> to vector<8x64xf32>
    %80 = arith.truncf %79 : vector<8x64xf32> to vector<8x64xbf16>
    %cst_24 = arith.constant dense<0.000000e+00> : vector<8x8xf32>
    %81 = tpu.matmul %76, %78, %cst_24 {dimension_numbers = #tpu.dot_dimension_numbers<[1], [1], [0], [0], [0, 0, 1, 0], [], []>} : vector<8x64xbf16>, vector<8x64xbf16>, vector<8x8xf32> -> vector<8x8xf32>
    %cst_25 = arith.constant dense<0xFF800000> : vector<8xf32>
    %82 = vector.multi_reduction <maximumf>, %81, %cst_25 [1] : vector<8x8xf32> to vector<8xf32>
    %83 = vector.shape_cast %82 : vector<8xf32> to vector<8x1xf32>
    %84 = vector.broadcast %83 : vector<8x1xf32> to vector<8x8xf32>
    %85 = arith.subf %81, %84 : vector<8x8xf32>
    %86 = math.exp %85 : vector<8x8xf32>
    %cst_26 = arith.constant dense<0.000000e+00> : vector<8xf32>
    %87 = vector.multi_reduction <add>, %86, %cst_26 [1] : vector<8x8xf32> to vector<8xf32>
    %88 = vector.shape_cast %87 : vector<8xf32> to vector<8x1xf32>
    %89 = tpu.reciprocal %88 {approx = true} : vector<8x1xf32> -> vector<8x1xf32>
    %90 = vector.broadcast %89 : vector<8x1xf32> to vector<8x8xf32>
    %91 = arith.mulf %86, %90 : vector<8x8xf32>
    %92 = arith.truncf %91 : vector<8x8xf32> to vector<8x8xbf16>
    %cst_27 = arith.constant dense<0.000000e+00> : vector<8x64xf32>
    %93 = tpu.matmul %92, %80, %cst_27 {dimension_numbers = #tpu.dot_dimension_numbers<[1], [0], [0], [1], [0, 0, 1, 1], [], []>} : vector<8x8xbf16>, vector<8x64xbf16>, vector<8x64xf32> -> vector<8x64xf32>
    %94 = vector.extract_strided_slice %34 {offsets = [0, 192], sizes = [8, 64], strides = [1, 1]} : vector<8x256xf32> to vector<8x64xf32>
    %95 = arith.truncf %94 : vector<8x64xf32> to vector<8x64xbf16>
    %96 = vector.extract_strided_slice %35 {offsets = [0, 192], sizes = [8, 64], strides = [1, 1]} : vector<8x256xf32> to vector<8x64xf32>
    %97 = arith.truncf %96 : vector<8x64xf32> to vector<8x64xbf16>
    %98 = vector.extract_strided_slice %36 {offsets = [0, 192], sizes = [8, 64], strides = [1, 1]} : vector<8x256xf32> to vector<8x64xf32>
    %99 = arith.truncf %98 : vector<8x64xf32> to vector<8x64xbf16>
    %cst_28 = arith.constant dense<0.000000e+00> : vector<8x8xf32>
    %100 = tpu.matmul %95, %97, %cst_28 {dimension_numbers = #tpu.dot_dimension_numbers<[1], [1], [0], [0], [0, 0, 1, 0], [], []>} : vector<8x64xbf16>, vector<8x64xbf16>, vector<8x8xf32> -> vector<8x8xf32>
    %cst_29 = arith.constant dense<0xFF800000> : vector<8xf32>
    %101 = vector.multi_reduction <maximumf>, %100, %cst_29 [1] : vector<8x8xf32> to vector<8xf32>
    %102 = vector.shape_cast %101 : vector<8xf32> to vector<8x1xf32>
    %103 = vector.broadcast %102 : vector<8x1xf32> to vector<8x8xf32>
    %104 = arith.subf %100, %103 : vector<8x8xf32>
    %105 = math.exp %104 : vector<8x8xf32>
    %cst_30 = arith.constant dense<0.000000e+00> : vector<8xf32>
    %106 = vector.multi_reduction <add>, %105, %cst_30 [1] : vector<8x8xf32> to vector<8xf32>
    %107 = vector.shape_cast %106 : vector<8xf32> to vector<8x1xf32>
    %108 = tpu.reciprocal %107 {approx = true} : vector<8x1xf32> -> vector<8x1xf32>
    %109 = vector.broadcast %108 : vector<8x1xf32> to vector<8x8xf32>
    %110 = arith.mulf %105, %109 : vector<8x8xf32>
    %111 = arith.truncf %110 : vector<8x8xf32> to vector<8x8xbf16>
    %cst_31 = arith.constant dense<0.000000e+00> : vector<8x64xf32>
    %112 = tpu.matmul %111, %99, %cst_31 {dimension_numbers = #tpu.dot_dimension_numbers<[1], [0], [0], [1], [0, 0, 1, 1], [], []>} : vector<8x8xbf16>, vector<8x64xbf16>, vector<8x64xf32> -> vector<8x64xf32>
    %113 = tpu.concatenate %55, %74, %93, %112 in 1 : vector<8x64xf32>, vector<8x64xf32>, vector<8x64xf32>, vector<8x64xf32> -> vector<8x256xf32>
    %114 = arith.truncf %113 : vector<8x256xf32> to vector<8x256xbf16>
    %c0_32 = arith.constant 0 : index
    %c0_33 = arith.constant 0 : index
    %c0_34 = arith.constant 0 : index
    %115 = vector.load %arg5[%c0_32, %c0_33, %c0_34] : memref<1x256x128xbf16, #tpu.memory_space<vmem>>, vector<1x256x128xbf16>
    %116 = vector.shape_cast %115 : vector<1x256x128xbf16> to vector<256x128xbf16>
    %cst_35 = arith.constant dense<0.000000e+00> : vector<8x128xf32>
    %117 = tpu.matmul %114, %116, %cst_35 {dimension_numbers = #tpu.dot_dimension_numbers<[1], [0], [0], [1], [0, 0, 1, 1], [], []>} : vector<8x256xbf16>, vector<256x128xbf16>, vector<8x128xf32> -> vector<8x128xf32>
    %c0_36 = arith.constant 0 : index
    %c0_37 = arith.constant 0 : index
    %c0_38 = arith.constant 0 : index
    %118 = vector.load %arg6[%c0_36, %c0_37, %c0_38] : memref<1x1x128xf32, #tpu.memory_space<vmem>>, vector<1x1x128xf32>
    %119 = vector.shape_cast %118 : vector<1x1x128xf32> to vector<1x128xf32>
    %120 = vector.broadcast %119 : vector<1x128xf32> to vector<8x128xf32>
    %121 = arith.addf %117, %120 : vector<8x128xf32>
    %122 = arith.addf %121, %29 : vector<8x128xf32>
    %c0_39 = arith.constant 0 : index
    %c0_40 = arith.constant 0 : index
    %c0_41 = arith.constant 0 : index
    %123 = vector.load %arg7[%c0_39, %c0_40, %c0_41] : memref<1x1x128xf32, #tpu.memory_space<vmem>>, vector<1x1x128xf32>
    %124 = vector.shape_cast %123 : vector<1x1x128xf32> to vector<1x128xf32>
    %c0_42 = arith.constant 0 : index
    %c0_43 = arith.constant 0 : index
    %c0_44 = arith.constant 0 : index
    %125 = vector.load %arg8[%c0_42, %c0_43, %c0_44] : memref<1x1x128xf32, #tpu.memory_space<vmem>>, vector<1x1x128xf32>
    %126 = vector.shape_cast %125 : vector<1x1x128xf32> to vector<1x128xf32>
    %cst_45 = arith.constant dense<0.000000e+00> : vector<8xf32>
    %127 = vector.multi_reduction <add>, %122, %cst_45 [1] : vector<8x128xf32> to vector<8xf32>
    %128 = vector.shape_cast %127 : vector<8xf32> to vector<8x1xf32>
    %cst_46 = arith.constant 1.280000e+02 : f32
    %129 = vector.broadcast %cst_46 : f32 to vector<8x1xf32>
    %130 = arith.divf %128, %129 : vector<8x1xf32>
    %131 = vector.broadcast %130 : vector<8x1xf32> to vector<8x128xf32>
    %132 = arith.subf %122, %131 : vector<8x128xf32>
    %133 = arith.mulf %132, %132 : vector<8x128xf32>
    %cst_47 = arith.constant dense<0.000000e+00> : vector<8xf32>
    %134 = vector.multi_reduction <add>, %133, %cst_47 [1] : vector<8x128xf32> to vector<8xf32>
    %135 = vector.shape_cast %134 : vector<8xf32> to vector<8x1xf32>
    %cst_48 = arith.constant 1.280000e+02 : f32
    %136 = vector.broadcast %cst_48 : f32 to vector<8x1xf32>
    %137 = arith.divf %135, %136 : vector<8x1xf32>
    %138 = vector.broadcast %130 : vector<8x1xf32> to vector<8x128xf32>
    %139 = arith.subf %122, %138 : vector<8x128xf32>
    %cst_49 = arith.constant 9.99999974E-6 : f32
    %140 = vector.broadcast %cst_49 : f32 to vector<8x1xf32>
    %141 = arith.addf %137, %140 : vector<8x1xf32>
    %142 = math.rsqrt %141 : vector<8x1xf32>
    %143 = vector.broadcast %142 : vector<8x1xf32> to vector<8x128xf32>
    %144 = arith.mulf %139, %143 : vector<8x128xf32>
    %145 = vector.broadcast %124 : vector<1x128xf32> to vector<8x128xf32>
    %146 = arith.mulf %144, %145 : vector<8x128xf32>
    %147 = vector.broadcast %126 : vector<1x128xf32> to vector<8x128xf32>
    %148 = arith.addf %146, %147 : vector<8x128xf32>
    %149 = arith.truncf %148 : vector<8x128xf32> to vector<8x128xbf16>
    %c0_50 = arith.constant 0 : index
    %c0_51 = arith.constant 0 : index
    %c0_52 = arith.constant 0 : index
    %150 = vector.load %arg9[%c0_50, %c0_51, %c0_52] : memref<1x128x1024xbf16, #tpu.memory_space<vmem>>, vector<1x128x1024xbf16>
    %151 = vector.shape_cast %150 : vector<1x128x1024xbf16> to vector<128x1024xbf16>
    %cst_53 = arith.constant dense<0.000000e+00> : vector<8x1024xf32>
    %152 = tpu.matmul %149, %151, %cst_53 {dimension_numbers = #tpu.dot_dimension_numbers<[1], [0], [0], [1], [0, 0, 1, 1], [], []>} : vector<8x128xbf16>, vector<128x1024xbf16>, vector<8x1024xf32> -> vector<8x1024xf32>
    %c0_54 = arith.constant 0 : index
    %c0_55 = arith.constant 0 : index
    %c0_56 = arith.constant 0 : index
    %153 = vector.load %arg10[%c0_54, %c0_55, %c0_56] : memref<1x1x1024xf32, #tpu.memory_space<vmem>>, vector<1x1x1024xf32>
    %154 = vector.shape_cast %153 : vector<1x1x1024xf32> to vector<1x1024xf32>
    %155 = vector.broadcast %154 : vector<1x1024xf32> to vector<8x1024xf32>
    %156 = arith.addf %152, %155 : vector<8x1024xf32>
    %157 = vector.extract_strided_slice %156 {offsets = [0, 0], sizes = [8, 512], strides = [1, 1]} : vector<8x1024xf32> to vector<8x512xf32>
    %158 = vector.extract_strided_slice %156 {offsets = [0, 512], sizes = [8, 512], strides = [1, 1]} : vector<8x1024xf32> to vector<8x512xf32>
    %159 = arith.mulf %158, %158 : vector<8x512xf32>
    %160 = arith.mulf %158, %159 : vector<8x512xf32>
    %cst_57 = arith.constant 4.471500e-02 : f32
    %161 = vector.broadcast %cst_57 : f32 to vector<8x512xf32>
    %162 = arith.mulf %161, %160 : vector<8x512xf32>
    %163 = arith.addf %158, %162 : vector<8x512xf32>
    %cst_58 = arith.constant 0.797884583 : f32
    %164 = vector.broadcast %cst_58 : f32 to vector<8x512xf32>
    %165 = arith.mulf %164, %163 : vector<8x512xf32>
    %166 = math.tanh %165 : vector<8x512xf32>
    %cst_59 = arith.constant 1.000000e+00 : f32
    %167 = vector.broadcast %cst_59 : f32 to vector<8x512xf32>
    %168 = arith.addf %167, %166 : vector<8x512xf32>
    %cst_60 = arith.constant 5.000000e-01 : f32
    %169 = vector.broadcast %cst_60 : f32 to vector<8x512xf32>
    %170 = arith.mulf %169, %168 : vector<8x512xf32>
    %171 = arith.mulf %158, %170 : vector<8x512xf32>
    %172 = arith.mulf %157, %171 : vector<8x512xf32>
    %173 = arith.truncf %172 : vector<8x512xf32> to vector<8x512xbf16>
    %c0_61 = arith.constant 0 : index
    %c0_62 = arith.constant 0 : index
    %c0_63 = arith.constant 0 : index
    %174 = vector.load %arg11[%c0_61, %c0_62, %c0_63] : memref<1x512x128xbf16, #tpu.memory_space<vmem>>, vector<1x512x128xbf16>
    %175 = vector.shape_cast %174 : vector<1x512x128xbf16> to vector<512x128xbf16>
    %cst_64 = arith.constant dense<0.000000e+00> : vector<8x128xf32>
    %176 = tpu.matmul %173, %175, %cst_64 {dimension_numbers = #tpu.dot_dimension_numbers<[1], [0], [0], [1], [0, 0, 1, 1], [], []>} : vector<8x512xbf16>, vector<512x128xbf16>, vector<8x128xf32> -> vector<8x128xf32>
    %c0_65 = arith.constant 0 : index
    %c0_66 = arith.constant 0 : index
    %c0_67 = arith.constant 0 : index
    %177 = vector.load %arg12[%c0_65, %c0_66, %c0_67] : memref<1x1x128xf32, #tpu.memory_space<vmem>>, vector<1x1x128xf32>
    %178 = vector.shape_cast %177 : vector<1x1x128xf32> to vector<1x128xf32>
    %179 = vector.broadcast %178 : vector<1x128xf32> to vector<8x128xf32>
    %180 = arith.addf %176, %179 : vector<8x128xf32>
    %181 = arith.addf %180, %148 : vector<8x128xf32>
    %c0_68 = arith.constant 0 : index
    %c0_69 = arith.constant 0 : index
    %182 = vector.load %arg14[%c0_68, %c0_69] : memref<8x128xf32, #tpu.memory_space<vmem>>, vector<8x128xf32>
    tpu.vector_store %arg14[%c0_68, %c0_69], %181 {strides = array<i32>} : memref<8x128xf32, #tpu.memory_space<vmem>>, vector<8x128xf32>,
    %c2_i32 = arith.constant 2 : i32
    %183 = arith.cmpi eq, %arg0, %c2_i32 : i32
    %184 = arith.extui %183 : i1 to i32
    %c0_i32_70 = arith.constant 0 : i32
    %185 = arith.cmpi ne, %184, %c0_i32_70 : i32
    scf.if %185 {
      %c0_71 = arith.constant 0 : index
      %c0_72 = arith.constant 0 : index
      %186 = vector.load %arg13[%c0_71, %c0_72] : memref<8x128xf32, #tpu.memory_space<vmem>>, vector<8x128xf32>
      tpu.vector_store %arg13[%c0_71, %c0_72], %181 {strides = array<i32>} : memref<8x128xf32, #tpu.memory_space<vmem>>, vector<8x128xf32>,
    } else {
    }
    return
  }
  func.func @transform_0(%arg0: i32) -> (i32, i32) {
    %c0_i32 = arith.constant 0 : i32
    %c0_i32_0 = arith.constant 0 : i32
    %c0_i32_1 = arith.constant 0 : i32
    return %c0_i32, %c0_i32_0 : i32, i32
  }
  func.func @transform_1(%arg0: i32) -> (i32, i32, i32) {
    %c0_i32 = arith.constant 0 : i32
    %c0_i32_0 = arith.constant 0 : i32
    %c0_i32_1 = arith.constant 0 : i32
    return %arg0, %c0_i32, %c0_i32_0 : i32, i32, i32
  }
  func.func @transform_2(%arg0: i32) -> (i32, i32, i32) {
    %c0_i32 = arith.constant 0 : i32
    %c0_i32_0 = arith.constant 0 : i32
    %c0_i32_1 = arith.constant 0 : i32
    return %arg0, %c0_i32, %c0_i32_0 : i32, i32, i32
  }
  func.func @transform_3(%arg0: i32) -> (i32, i32, i32) {
    %c0_i32 = arith.constant 0 : i32
    %c0_i32_0 = arith.constant 0 : i32
    %c0_i32_1 = arith.constant 0 : i32
    return %arg0, %c0_i32, %c0_i32_0 : i32, i32, i32
  }
  func.func @transform_4(%arg0: i32) -> (i32, i32, i32) {
    %c0_i32 = arith.constant 0 : i32
    %c0_i32_0 = arith.constant 0 : i32
    %c0_i32_1 = arith.constant 0 : i32
    return %arg0, %c0_i32, %c0_i32_0 : i32, i32, i32
  }
  func.func @transform_5(%arg0: i32) -> (i32, i32, i32) {
    %c0_i32 = arith.constant 0 : i32
    %c0_i32_0 = arith.constant 0 : i32
    %c0_i32_1 = arith.constant 0 : i32
    return %arg0, %c0_i32, %c0_i32_0 : i32, i32, i32
  }
  func.func @transform_6(%arg0: i32) -> (i32, i32, i32) {
    %c0_i32 = arith.constant 0 : i32
    %c0_i32_0 = arith.constant 0 : i32
    %c0_i32_1 = arith.constant 0 : i32
    return %arg0, %c0_i32, %c0_i32_0 : i32, i32, i32
  }
  func.func @transform_7(%arg0: i32) -> (i32, i32, i32) {
    %c0_i32 = arith.constant 0 : i32
    %c0_i32_0 = arith.constant 0 : i32
    %c0_i32_1 = arith.constant 0 : i32
    return %arg0, %c0_i32, %c0_i32_0 : i32, i32, i32
  }
  func.func @transform_8(%arg0: i32) -> (i32, i32, i32) {
    %c0_i32 = arith.constant 0 : i32
    %c0_i32_0 = arith.constant 0 : i32
    %c0_i32_1 = arith.constant 0 : i32
    return %arg0, %c0_i32, %c0_i32_0 : i32, i32, i32
  }
  func.func @transform_9(%arg0: i32) -> (i32, i32, i32) {
    %c0_i32 = arith.constant 0 : i32
    %c0_i32_0 = arith.constant 0 : i32
    %c0_i32_1 = arith.constant 0 : i32
    return %arg0, %c0_i32, %c0_i32_0 : i32, i32, i32
  }
  func.func @transform_10(%arg0: i32) -> (i32, i32, i32) {
    %c0_i32 = arith.constant 0 : i32
    %c0_i32_0 = arith.constant 0 : i32
    %c0_i32_1 = arith.constant 0 : i32
    return %arg0, %c0_i32, %c0_i32_0 : i32, i32, i32
  }
  func.func @transform_11(%arg0: i32) -> (i32, i32, i32) {
    %c0_i32 = arith.constant 0 : i32
    %c0_i32_0 = arith.constant 0 : i32
    %c0_i32_1 = arith.constant 0 : i32
    return %arg0, %c0_i32, %c0_i32_0 : i32, i32, i32
  }
  func.func @transform_12(%arg0: i32) -> (i32, i32) {
    %c0_i32 = arith.constant 0 : i32
    %c0_i32_0 = arith.constant 0 : i32
    %c0_i32_1 = arith.constant 0 : i32
    return %c0_i32, %c0_i32_0 : i32, i32
  }
}

</mosaic_0001>

<llo_original>
// kernel: tpu_custom_call.1
$region0: #{tpu_custom_call.1}
  #allocation0 [shape = 'u32[]', space=smem, size = 0x4, offset = 0x4, fixed_abs, tag = 'smem constant byte address 0x4 - core index']
  #allocation1 [shape = 'u32[144,128]{1,0:T(1,128)}', space=vmem, size = 0x12000, scoped, tag = 'internal scratch']
  #allocation2 [shape = 'f32[8,128]{1,0:T(8,128)}', space=vmem, size = 0x1000, scoped, tag = 'scratch operand']
  %s0 = inlined_call_operand.hbm [shape: f32[8,128], index: 0, kind: input, shape index: {}]
  %s1 = inlined_call_operand.vmem [shape: f32[3,1,128], index: 1, kind: input, shape index: {}]
  %s2 = inlined_call_operand.vmem [shape: f32[3,1,128], index: 2, kind: input, shape index: {}]
  %s3 = inlined_call_operand.hbm [shape: bf16[3,128,768], index: 3, kind: input, shape index: {}]
  %s4 = inlined_call_operand.hbm [shape: bf16[3,256,128], index: 4, kind: input, shape index: {}]
  %s5 = inlined_call_operand.vmem [shape: f32[3,1,128], index: 5, kind: input, shape index: {}]
  %s6 = inlined_call_operand.hbm [shape: f32[3,1,128], index: 6, kind: input, shape index: {}]
  %s7 = inlined_call_operand.hbm [shape: f32[3,1,128], index: 7, kind: input, shape index: {}]
  %s8 = inlined_call_operand.hbm [shape: bf16[3,128,1024], index: 8, kind: input, shape index: {}]
  %s9 = inlined_call_operand.vmem [shape: f32[3,1,1024], index: 9, kind: input, shape index: {}]
  %s10 = inlined_call_operand.hbm [shape: bf16[3,512,128], index: 10, kind: input, shape index: {}]
  %s11 = inlined_call_operand.vmem [shape: f32[3,1,128], index: 11, kind: input, shape index: {}]
  %s12 = inlined_call_operand.hbm [shape: f32[8,128], index: 12, kind: output, shape index: {}]
  %s13 = sld [smem:[#allocation0]]
  $region117: #{tpu_custom_call.1} parent=0
    _
  %s15 = ssub.s32 1, %s13
  %s16 = scalar_select 0, %s15, %s13
  $region1: #{tpu_custom_call.1} parent=0
    #allocation3 [shape = 'u8[4096]{0}', space=vmem, size = 0x1000, scoped, tag = 'input window, operand 0, single buffered']
    #allocation4 [shape = 's32[2]{0}', space=sflag, size = 0x8, scoped, tag = 'scoped memory for tpu_custom_call.1']
    #allocation5 [shape = 's32[2]{0}', space=sflag, size = 0x8, scoped, tag = 'scoped memory for tpu_custom_call.1']
    #allocation6 [shape = 'u8[393216]{0}', space=vmem, size = 0x60000, scoped, tag = 'input window, operand 3']
    #allocation7 [shape = 's32[2]{0}', space=sflag, size = 0x8, scoped, tag = 'scoped memory for tpu_custom_call.1']
    #allocation8 [shape = 'u8[131072]{0}', space=vmem, size = 0x20000, scoped, tag = 'input window, operand 4']
    #allocation9 [shape = 'u8[1024]{0}', space=vmem, size = 0x400, scoped, tag = 'input window, operand 6']
    #allocation10 [shape = 's32[2]{0}', space=sflag, size = 0x8, scoped, tag = 'scoped memory for tpu_custom_call.1']
    #allocation11 [shape = 'u8[1024]{0}', space=vmem, size = 0x400, scoped, tag = 'input window, operand 7']
    #allocation12 [shape = 'u8[524288]{0}', space=vmem, size = 0x80000, scoped, tag = 'input window, operand 8']
    #allocation13 [shape = 's32[2]{0}', space=sflag, size = 0x8, scoped, tag = 'scoped memory for tpu_custom_call.1']
    #allocation14 [shape = 'u8[262144]{0}', space=vmem, size = 0x40000, scoped, tag = 'input window, operand 10']
    #allocation15 [shape = 'u8[4096]{0}', space=vmem, size = 0x1000, scoped, tag = 'output window, operand 0, single buffered']
    %17 = vsyncpa [#allocation4], 0
    %18 = vsyncpa [#allocation7], 0
    %s19 = scalar_lea.sflag [#allocation7], 1
    %20 = vsyncpa %s19, 0
    %21 = vsyncpa [#allocation10], 0
    %s22 = scalar_lea.sflag [#allocation10], 1
    %23 = vsyncpa %s22, 0
    %24 = vsyncpa [#allocation13], 0
    %s25 = scalar_lea.sflag [#allocation13], 1
    %26 = vsyncpa %s25, 0
    %27 = vsyncpa [#allocation5], 0
    loop: start=0, step=1, limit=5
    $region2: #{tpu_custom_call.1} parent=1 // loop_pre_header
      _
    $region3: #{tpu_custom_call.1} parent=1 // loop_header
      %s29 = sphi 0, %s33
      %p30 = scmp.ge.s32.totalorder %s29, 5
      %s37 = sphi 0, %s37
      %s39 = sphi 0, %s37
      %s40 = sphi 0, %s39
      %s54 = sphi 0, %s40
      %s60 = sphi 0, %s62
      %s63 = sphi 0, %s60
      %s64 = sphi 0, %s63
      %s80 = sphi 0, %s64
      %s86 = sphi 0, %s88
      %s89 = sphi 0, %s86
      %s90 = sphi 0, %s89
      %s106 = sphi 0, %s90
      %s112 = sphi 0, %s114
      %s115 = sphi 0, %s112
      %s116 = sphi 0, %s115
      %s132 = sphi 0, %s116
      %s138 = sphi 0, %s140
      %s141 = sphi 0, %s138
      %s142 = sphi 0, %s141
      %s158 = sphi 0, %s142
      %s164 = sphi 0, %s166
      %s167 = sphi 0, %s164
      %s168 = sphi 0, %s167
      %s184 = sphi 0, %s168
      %s190 = sphi 0, %s192
      %s193 = sphi 0, %s190
      %s194 = sphi 0, %s193
      %s210 = sphi 0, %s194
      %s216 = sphi 0, %s218
      %s219 = sphi 0, %s216
      %s220 = sphi 0, %s219
      %s236 = sphi 0, %s220
      %s242 = sphi 0, %s244
      %s245 = sphi 0, %s242
      %s246 = sphi 0, %s245
      %s262 = sphi 0, %s246
      %s268 = sphi 0, %s270
      %s271 = sphi 0, %s268
      %s272 = sphi 0, %s271
      %s288 = sphi 0, %s272
      %s294 = sphi 0, %s296
      %s297 = sphi 0, %s294
      %s298 = sphi 0, %s297
      %s314 = sphi 0, %s298
      %s320 = sphi 0, %s322
      %s323 = sphi 0, %s320
      %s324 = sphi 0, %s323
      %s340 = sphi 0, %s324
      %s344 = sphi 0, %s344
      %s346 = sphi 0, %s344
      %s347 = sphi 0, %s346
      %s361 = sphi 0, %s347
    $region4: #{tpu_custom_call.1} parent=1 // loop_header_branch
      %32 = sbr.rel (%p30) target = $region8
    $region5: #{tpu_custom_call.1} parent=1 // loop_body
      %s34 = ssub.s32 %s29, 1
      %s35 = ssub.s32 %s29, 2
      %s36 = sadd.s32 %s29, 1
      %s38 = sadd.s32 %s37, 1
      %p41 = scmp.eq.s32.totalorder %s29, 2
      %p42 = scmp.ne.s32.totalorder %s37, %s39
      %p43 = scmp.eq.s32.totalorder %s29, 0
      %p44 = por %p42, %p43
      %p45 = scmp.ne.s32.totalorder %s37, %s39
      %p46 = scmp.eq.s32.totalorder %s34, 2
      %p47 = por %p45, %p46
      %p48 = scmp.ne.s32.totalorder %s39, %s40
      %p49 = scmp.eq.s32.totalorder %s34, 0
      %p50 = por %p48, %p49
      %p51 = scmp.ne.s32.totalorder %s39, %s40
      %p52 = scmp.eq.s32.totalorder %s35, 2
      %p53 = por %p51, %p52
      %p55 = scmp.ne.s32.totalorder %s40, %s54
      %p56 = scmp.eq.s32.totalorder %s35, 0
      %p57 = por %p55, %p56
      %s58 = ssub.s32 %s29, %s36
      %p59 = scmp.eq.s32.totalorder %s58, 0
      %s61 = sadd.s32 %s60, 1
      %s62 = scalar_select %p59, %s60, %s61
      %p65 = pneg %p59
      %p66 = scmp.eq.s32.totalorder %s29, 2
      %p67 = por %p65, %p66
      %p68 = scmp.ne.s32.totalorder %s60, %s63
      %p69 = scmp.eq.s32.totalorder %s29, 0
      %p70 = por %p68, %p69
      %p71 = scmp.ne.s32.totalorder %s60, %s63
      %p72 = scmp.eq.s32.totalorder %s34, 2
      %p73 = por %p71, %p72
      %p74 = scmp.ne.s32.totalorder %s63, %s64
      %p75 = scmp.eq.s32.totalorder %s34, 0
      %p76 = por %p74, %p75
      %p77 = scmp.ne.s32.totalorder %s63, %s64
      %p78 = scmp.eq.s32.totalorder %s35, 2
      %p79 = por %p77, %p78
      %p81 = scmp.ne.s32.totalorder %s64, %s80
      %p82 = scmp.eq.s32.totalorder %s35, 0
      %p83 = por %p81, %p82
      %s84 = ssub.s32 %s29, %s36
      %p85 = scmp.eq.s32.totalorder %s84, 0
      %s87 = sadd.s32 %s86, 1
      %s88 = scalar_select %p85, %s86, %s87
      %p91 = pneg %p85
      %p92 = scmp.eq.s32.totalorder %s29, 2
      %p93 = por %p91, %p92
      %p94 = scmp.ne.s32.totalorder %s86, %s89
      %p95 = scmp.eq.s32.totalorder %s29, 0
      %p96 = por %p94, %p95
      %p97 = scmp.ne.s32.totalorder %s86, %s89
      %p98 = scmp.eq.s32.totalorder %s34, 2
      %p99 = por %p97, %p98
      %p100 = scmp.ne.s32.totalorder %s89, %s90
      %p101 = scmp.eq.s32.totalorder %s34, 0
      %p102 = por %p100, %p101
      %p103 = scmp.ne.s32.totalorder %s89, %s90
      %p104 = scmp.eq.s32.totalorder %s35, 2
      %p105 = por %p103, %p104
      %p107 = scmp.ne.s32.totalorder %s90, %s106
      %p108 = scmp.eq.s32.totalorder %s35, 0
      %p109 = por %p107, %p108
      %s110 = ssub.s32 %s29, %s36
      %p111 = scmp.eq.s32.totalorder %s110, 0
      %s113 = sadd.s32 %s112, 1
      %s114 = scalar_select %p111, %s112, %s113
      %p117 = pneg %p111
      %p118 = scmp.eq.s32.totalorder %s29, 2
      %p119 = por %p117, %p118
      %p120 = scmp.ne.s32.totalorder %s112, %s115
      %p121 = scmp.eq.s32.totalorder %s29, 0
      %p122 = por %p120, %p121
      %p123 = scmp.ne.s32.totalorder %s112, %s115
      %p124 = scmp.eq.s32.totalorder %s34, 2
      %p125 = por %p123, %p124
      %p126 = scmp.ne.s32.totalorder %s115, %s116
      %p127 = scmp.eq.s32.totalorder %s34, 0
      %p128 = por %p126, %p127
      %p129 = scmp.ne.s32.totalorder %s115, %s116
      %p130 = scmp.eq.s32.totalorder %s35, 2
      %p131 = por %p129, %p130
      %p133 = scmp.ne.s32.totalorder %s116, %s132
      %p134 = scmp.eq.s32.totalorder %s35, 0
      %p135 = por %p133, %p134
      %s136 = ssub.s32 %s29, %s36
      %p137 = scmp.eq.s32.totalorder %s136, 0
      %s139 = sadd.s32 %s138, 1
      %s140 = scalar_select %p137, %s138, %s139
      %p143 = pneg %p137
      %p144 = scmp.eq.s32.totalorder %s29, 2
      %p145 = por %p143, %p144
      %p146 = scmp.ne.s32.totalorder %s138, %s141
      %p147 = scmp.eq.s32.totalorder %s29, 0
      %p148 = por %p146, %p147
      %p149 = scmp.ne.s32.totalorder %s138, %s141
      %p150 = scmp.eq.s32.totalorder %s34, 2
      %p151 = por %p149, %p150
      %p152 = scmp.ne.s32.totalorder %s141, %s142
      %p153 = scmp.eq.s32.totalorder %s34, 0
      %p154 = por %p152, %p153
      %p155 = scmp.ne.s32.totalorder %s141, %s142
      %p156 = scmp.eq.s32.totalorder %s35, 2
      %p157 = por %p155, %p156
      %p159 = scmp.ne.s32.totalorder %s142, %s158
      %p160 = scmp.eq.s32.totalorder %s35, 0
      %p161 = por %p159, %p160
      %s162 = ssub.s32 %s29, %s36
      %p163 = scmp.eq.s32.totalorder %s162, 0
      %s165 = sadd.s32 %s164, 1
      %s166 = scalar_select %p163, %s164, %s165
      %p169 = pneg %p163
      %p170 = scmp.eq.s32.totalorder %s29, 2
      %p171 = por %p169, %p170
      %p172 = scmp.ne.s32.totalorder %s164, %s167
      %p173 = scmp.eq.s32.totalorder %s29, 0
      %p174 = por %p172, %p173
      %p175 = scmp.ne.s32.totalorder %s164, %s167
      %p176 = scmp.eq.s32.totalorder %s34, 2
      %p177 = por %p175, %p176
      %p178 = scmp.ne.s32.totalorder %s167, %s168
      %p179 = scmp.eq.s32.totalorder %s34, 0
      %p180 = por %p178, %p179
      %p181 = scmp.ne.s32.totalorder %s167, %s168
      %p182 = scmp.eq.s32.totalorder %s35, 2
      %p183 = por %p181, %p182
      %p185 = scmp.ne.s32.totalorder %s168, %s184
      %p186 = scmp.eq.s32.totalorder %s35, 0
      %p187 = por %p185, %p186
      %s188 = ssub.s32 %s29, %s36
      %p189 = scmp.eq.s32.totalorder %s188, 0
      %s191 = sadd.s32 %s190, 1
      %s192 = scalar_select %p189, %s190, %s191
      %p195 = pneg %p189
      %p196 = scmp.eq.s32.totalorder %s29, 2
      %p197 = por %p195, %p196
      %p198 = scmp.ne.s32.totalorder %s190, %s193
      %p199 = scmp.eq.s32.totalorder %s29, 0
      %p200 = por %p198, %p199
      %p201 = scmp.ne.s32.totalorder %s190, %s193
      %p202 = scmp.eq.s32.totalorder %s34, 2
      %p203 = por %p201, %p202
      %p204 = scmp.ne.s32.totalorder %s193, %s194
      %p205 = scmp.eq.s32.totalorder %s34, 0
      %p206 = por %p204, %p205
      %p207 = scmp.ne.s32.totalorder %s193, %s194
      %p208 = scmp.eq.s32.totalorder %s35, 2
      %p209 = por %p207, %p208
      %p211 = scmp.ne.s32.totalorder %s194, %s210
      %p212 = scmp.eq.s32.totalorder %s35, 0
      %p213 = por %p211, %p212
      %s214 = ssub.s32 %s29, %s36
      %p215 = scmp.eq.s32.totalorder %s214, 0
      %s217 = sadd.s32 %s216, 1
      %s218 = scalar_select %p215, %s216, %s217
      %p221 = pneg %p215
      %p222 = scmp.eq.s32.totalorder %s29, 2
      %p223 = por %p221, %p222
      %p224 = scmp.ne.s32.totalorder %s216, %s219
      %p225 = scmp.eq.s32.totalorder %s29, 0
      %p226 = por %p224, %p225
      %p227 = scmp.ne.s32.totalorder %s216, %s219
      %p228 = scmp.eq.s32.totalorder %s34, 2
      %p229 = por %p227, %p228
      %p230 = scmp.ne.s32.totalorder %s219, %s220
      %p231 = scmp.eq.s32.totalorder %s34, 0
      %p232 = por %p230, %p231
      %p233 = scmp.ne.s32.totalorder %s219, %s220
      %p234 = scmp.eq.s32.totalorder %s35, 2
      %p235 = por %p233, %p234
      %p237 = scmp.ne.s32.totalorder %s220, %s236
      %p238 = scmp.eq.s32.totalorder %s35, 0
      %p239 = por %p237, %p238
      %s240 = ssub.s32 %s29, %s36
      %p241 = scmp.eq.s32.totalorder %s240, 0
      %s243 = sadd.s32 %s242, 1
      %s244 = scalar_select %p241, %s242, %s243
      %p247 = pneg %p241
      %p248 = scmp.eq.s32.totalorder %s29, 2
      %p249 = por %p247, %p248
      %p250 = scmp.ne.s32.totalorder %s242, %s245
      %p251 = scmp.eq.s32.totalorder %s29, 0
      %p252 = por %p250, %p251
      %p253 = scmp.ne.s32.totalorder %s242, %s245
      %p254 = scmp.eq.s32.totalorder %s34, 2
      %p255 = por %p253, %p254
      %p256 = scmp.ne.s32.totalorder %s245, %s246
      %p257 = scmp.eq.s32.totalorder %s34, 0
      %p258 = por %p256, %p257
      %p259 = scmp.ne.s32.totalorder %s245, %s246
      %p260 = scmp.eq.s32.totalorder %s35, 2
      %p261 = por %p259, %p260
      %p263 = scmp.ne.s32.totalorder %s246, %s262
      %p264 = scmp.eq.s32.totalorder %s35, 0
      %p265 = por %p263, %p264
      %s266 = ssub.s32 %s29, %s36
      %p267 = scmp.eq.s32.totalorder %s266, 0
      %s269 = sadd.s32 %s268, 1
      %s270 = scalar_select %p267, %s268, %s269
      %p273 = pneg %p267
      %p274 = scmp.eq.s32.totalorder %s29, 2
      %p275 = por %p273, %p274
      %p276 = scmp.ne.s32.totalorder %s268, %s271
      %p277 = scmp.eq.s32.totalorder %s29, 0
      %p278 = por %p276, %p277
      %p279 = scmp.ne.s32.totalorder %s268, %s271
      %p280 = scmp.eq.s32.totalorder %s34, 2
      %p281 = por %p279, %p280
      %p282 = scmp.ne.s32.totalorder %s271, %s272
      %p283 = scmp.eq.s32.totalorder %s34, 0
      %p284 = por %p282, %p283
      %p285 = scmp.ne.s32.totalorder %s271, %s272
      %p286 = scmp.eq.s32.totalorder %s35, 2
      %p287 = por %p285, %p286
      %p289 = scmp.ne.s32.totalorder %s272, %s288
      %p290 = scmp.eq.s32.totalorder %s35, 0
      %p291 = por %p289, %p290
      %s292 = ssub.s32 %s29, %s36
      %p293 = scmp.eq.s32.totalorder %s292, 0
      %s295 = sadd.s32 %s294, 1
      %s296 = scalar_select %p293, %s294, %s295
      %p299 = pneg %p293
      %p300 = scmp.eq.s32.totalorder %s29, 2
      %p301 = por %p299, %p300
      %p302 = scmp.ne.s32.totalorder %s294, %s297
      %p303 = scmp.eq.s32.totalorder %s29, 0
      %p304 = por %p302, %p303
      %p305 = scmp.ne.s32.totalorder %s294, %s297
      %p306 = scmp.eq.s32.totalorder %s34, 2
      %p307 = por %p305, %p306
      %p308 = scmp.ne.s32.totalorder %s297, %s298
      %p309 = scmp.eq.s32.totalorder %s34, 0
      %p310 = por %p308, %p309
      %p311 = scmp.ne.s32.totalorder %s297, %s298
      %p312 = scmp.eq.s32.totalorder %s35, 2
      %p313 = por %p311, %p312
      %p315 = scmp.ne.s32.totalorder %s298, %s314
      %p316 = scmp.eq.s32.totalorder %s35, 0
      %p317 = por %p315, %p316
      %s318 = ssub.s32 %s29, %s36
      %p319 = scmp.eq.s32.totalorder %s318, 0
      %s321 = sadd.s32 %s320, 1
      %s322 = scalar_select %p319, %s320, %s321
      %p325 = pneg %p319
      %p326 = scmp.eq.s32.totalorder %s29, 2
      %p327 = por %p325, %p326
      %p328 = scmp.ne.s32.totalorder %s320, %s323
      %p329 = scmp.eq.s32.totalorder %s29, 0
      %p330 = por %p328, %p329
      %p331 = scmp.ne.s32.totalorder %s320, %s323
      %p332 = scmp.eq.s32.totalorder %s34, 2
      %p333 = por %p331, %p332
      %p334 = scmp.ne.s32.totalorder %s323, %s324
      %p335 = scmp.eq.s32.totalorder %s34, 0
      %p336 = por %p334, %p335
      %p337 = scmp.ne.s32.totalorder %s323, %s324
      %p338 = scmp.eq.s32.totalorder %s35, 2
      %p339 = por %p337, %p338
      %p341 = scmp.ne.s32.totalorder %s324, %s340
      %p342 = scmp.eq.s32.totalorder %s35, 0
      %p343 = por %p341, %p342
      %s345 = sadd.s32 %s344, 1
      %p348 = scmp.eq.s32.totalorder %s29, 2
      %p349 = scmp.ne.s32.totalorder %s344, %s346
      %p350 = scmp.eq.s32.totalorder %s29, 0
      %p351 = por %p349, %p350
      %p352 = scmp.ne.s32.totalorder %s344, %s346
      %p353 = scmp.eq.s32.totalorder %s34, 2
      %p354 = por %p352, %p353
      %p355 = scmp.ne.s32.totalorder %s346, %s347
      %p356 = scmp.eq.s32.totalorder %s34, 0
      %p357 = por %p355, %p356
      %p358 = scmp.ne.s32.totalorder %s346, %s347
      %p359 = scmp.eq.s32.totalorder %s35, 2
      %p360 = por %p358, %p359
      %p362 = scmp.ne.s32.totalorder %s347, %s361
      %p363 = scmp.eq.s32.totalorder %s35, 0
      %p364 = por %p362, %p363
      %p365 = scmp.le.s32.totalorder 1, %s29
      %p366 = scmp.lt.s32.totalorder %s29, 4
      %p367 = pnand %p365, %p366
      %p368 = pneg %p367
      // Predicated region
      $region9: #{tpu_custom_call.1} parent=5 // pred_check
        _
      $region10: #{tpu_custom_call.1} parent=5 // pred_check_branch
        %370 = sbr.rel (%p367) target = $region12
      $region11: #{tpu_custom_call.1} parent=5 // pred_region
        %s371 = ssub.s32 %s29, 1
        // Predicated region
        $region13: #{tpu_custom_call.1} parent=11 // pred_check
          %p372 = pneg %p50
        $region14: #{tpu_custom_call.1} parent=11 // pred_check_branch
          %374 = sbr.rel (%p372) target = $region16
        $region15: #{tpu_custom_call.1} parent=11 // pred_region
          %s376 = ssub.s32 128, 128
          %377 = vsyncadd [#allocation4], %s376
          %s379 = sshll.u32 [#allocation3], 4
          %s380 = int_to_ptr.vmem [resolvable:$true] %s379
          %382 = dma.hbm_to_vmem [thread:$0]  %s0, 128, %s380, [#allocation4]
        $region16: #{tpu_custom_call.1} parent=11 // pred_fallthru
          _
      $region12: #{tpu_custom_call.1} parent=5 // pred_fallthru
        _
      %p383 = scmp.lt.s32.totalorder %s29, 3
      // Predicated region
      $region17: #{tpu_custom_call.1} parent=5 // pred_check
        %p384 = pneg %p383
      $region18: #{tpu_custom_call.1} parent=5 // pred_check_branch
        %386 = sbr.rel (%p384) target = $region20
      $region19: #{tpu_custom_call.1} parent=5 // pred_region
        // Predicated region
        $region21: #{tpu_custom_call.1} parent=19 // pred_check
          %p387 = pneg %p70
        $region22: #{tpu_custom_call.1} parent=19 // pred_check_branch
          %389 = sbr.rel (%p387) target = $region24
        $region23: #{tpu_custom_call.1} parent=19 // pred_region
          %p390 = scmp.lt.s32.totalorder %s29, 2
          %s391 = scalar_select %p390, %s29, 2
          %s392 = scalar_lea.vmem %s1, %s391
        $region24: #{tpu_custom_call.1} parent=19 // pred_fallthru
          _
        // Predicated region
        $region25: #{tpu_custom_call.1} parent=19 // pred_check
          %p393 = pneg %p96
        $region26: #{tpu_custom_call.1} parent=19 // pred_check_branch
          %395 = sbr.rel (%p393) target = $region28
        $region27: #{tpu_custom_call.1} parent=19 // pred_region
          %p396 = scmp.lt.s32.totalorder %s29, 2
          %s397 = scalar_select %p396, %s29, 2
          %s398 = scalar_lea.vmem %s2, %s397
        $region28: #{tpu_custom_call.1} parent=19 // pred_fallthru
          _
        // Predicated region
        $region29: #{tpu_custom_call.1} parent=19 // pred_check
          %p399 = pneg %p122
        $region30: #{tpu_custom_call.1} parent=19 // pred_check_branch
          %401 = sbr.rel (%p399) target = $region32
        $region31: #{tpu_custom_call.1} parent=19 // pred_region
          %s402 = sand.u32 %s29, 1
          %s403 = scalar_lea.sflag [#allocation7], %s402
          %s404 = sand.u32 %s112, 1
          %s405 = smul.addr %s404, 384
          %s406 = scalar_lea.vmem [#allocation6], %s405
          %s408 = ssub.s32 6144, 6144
          %409 = vsyncadd %s403, %s408
          %s410 = smul.addr %s29, 96
          %s411 = smul.addr %s410, 64
          %s412 = scalar_lea.hbm %s3, %s411
          %s413 = sshll.u32 %s406, 4
          %s414 = int_to_ptr.vmem [resolvable:$true] %s413
          %419 = dma.hbm_to_vmem [thread:$0]  %s412, 6144, %s414, %s403, 384, 384, 24
        $region32: #{tpu_custom_call.1} parent=19 // pred_fallthru
          _
        // Predicated region
        $region33: #{tpu_custom_call.1} parent=19 // pred_check
          %p420 = pneg %p148
        $region34: #{tpu_custom_call.1} parent=19 // pred_check_branch
          %422 = sbr.rel (%p420) target = $region36
        $region35: #{tpu_custom_call.1} parent=19 // pred_region
          %s423 = sand.u32 %s29, 1
          %s424 = scalar_lea.sflag [#allocation7], %s423
          %s425 = sand.u32 %s138, 1
          %s426 = smul.addr %s425, 128
          %s427 = scalar_lea.vmem [#allocation8], %s426
          %s429 = ssub.s32 2048, 2048
          %430 = vsyncadd %s424, %s429
          %s431 = smul.addr %s29, 32
          %s432 = smul.addr %s431, 64
          %s433 = scalar_lea.hbm %s4, %s432
          %s434 = sshll.u32 %s427, 4
          %s435 = int_to_ptr.vmem [resolvable:$true] %s434
          %440 = dma.hbm_to_vmem [thread:$0]  %s433, 2048, %s435, %s424, 64, 64, 4
        $region36: #{tpu_custom_call.1} parent=19 // pred_fallthru
          _
        // Predicated region
        $region37: #{tpu_custom_call.1} parent=19 // pred_check
          %p441 = pneg %p174
        $region38: #{tpu_custom_call.1} parent=19 // pred_check_branch
          %443 = sbr.rel (%p441) target = $region40
        $region39: #{tpu_custom_call.1} parent=19 // pred_region
          %p444 = scmp.lt.s32.totalorder %s29, 2
          %s445 = scalar_select %p444, %s29, 2
          %s446 = scalar_lea.vmem %s5, %s445
        $region40: #{tpu_custom_call.1} parent=19 // pred_fallthru
          _
        // Predicated region
        $region41: #{tpu_custom_call.1} parent=19 // pred_check
          %p447 = pneg %p200
        $region42: #{tpu_custom_call.1} parent=19 // pred_check_branch
          %449 = sbr.rel (%p447) target = $region44
        $region43: #{tpu_custom_call.1} parent=19 // pred_region
          %s450 = sand.u32 %s29, 1
          %s451 = scalar_lea.sflag [#allocation10], %s450
          %s452 = sand.u32 %s190, 1
          %s453 = scalar_lea.vmem [#allocation9], %s452
          %s455 = ssub.s32 16, 16
          %456 = vsyncadd %s451, %s455
          %s457 = smul.addr %s29, 16
          %s458 = scalar_lea.hbm %s6, %s457
          %s460 = sshll.u32 %s453, 4
          %s461 = int_to_ptr.vmem [resolvable:$true] %s460
          %463 = dma.hbm_to_vmem [thread:$0]  %s458, 16, %s461, %s451
        $region44: #{tpu_custom_call.1} parent=19 // pred_fallthru
          _
        // Predicated region
        $region45: #{tpu_custom_call.1} parent=19 // pred_check
          %p464 = pneg %p226
        $region46: #{tpu_custom_call.1} parent=19 // pred_check_branch
          %466 = sbr.rel (%p464) target = $region48
        $region47: #{tpu_custom_call.1} parent=19 // pred_region
          %s467 = sand.u32 %s29, 1
          %s468 = scalar_lea.sflag [#allocation10], %s467
          %s469 = sand.u32 %s216, 1
          %s470 = scalar_lea.vmem [#allocation11], %s469
          %s472 = ssub.s32 16, 16
          %473 = vsyncadd %s468, %s472
          %s474 = smul.addr %s29, 16
          %s475 = scalar_lea.hbm %s7, %s474
          %s477 = sshll.u32 %s470, 4
          %s478 = int_to_ptr.vmem [resolvable:$true] %s477
          %480 = dma.hbm_to_vmem [thread:$0]  %s475, 16, %s478, %s468
        $region48: #{tpu_custom_call.1} parent=19 // pred_fallthru
          _
        // Predicated region
        $region49: #{tpu_custom_call.1} parent=19 // pred_check
          %p481 = pneg %p252
        $region50: #{tpu_custom_call.1} parent=19 // pred_check_branch
          %483 = sbr.rel (%p481) target = $region52
        $region51: #{tpu_custom_call.1} parent=19 // pred_region
          %s484 = sand.u32 %s29, 1
          %s485 = scalar_lea.sflag [#allocation13], %s484
          %s486 = sand.u32 %s242, 1
          %s487 = smul.addr %s486, 512
          %s488 = scalar_lea.vmem [#allocation12], %s487
          %s490 = ssub.s32 8192, 8192
          %491 = vsyncadd %s485, %s490
          %s492 = smul.addr %s29, 128
          %s493 = smul.addr %s492, 64
          %s494 = scalar_lea.hbm %s8, %s493
          %s495 = sshll.u32 %s488, 4
          %s496 = int_to_ptr.vmem [resolvable:$true] %s495
          %501 = dma.hbm_to_vmem [thread:$0]  %s494, 8192, %s496, %s485, 512, 512, 32
        $region52: #{tpu_custom_call.1} parent=19 // pred_fallthru
          _
        // Predicated region
        $region53: #{tpu_custom_call.1} parent=19 // pred_check
          %p502 = pneg %p278
        $region54: #{tpu_custom_call.1} parent=19 // pred_check_branch
          %504 = sbr.rel (%p502) target = $region56
        $region55: #{tpu_custom_call.1} parent=19 // pred_region
          %p505 = scmp.lt.s32.totalorder %s29, 2
          %s506 = scalar_select %p505, %s29, 2
          %s507 = smul.addr %s506, 8
          %s508 = scalar_lea.vmem %s9, %s507
        $region56: #{tpu_custom_call.1} parent=19 // pred_fallthru
          _
        // Predicated region
        $region57: #{tpu_custom_call.1} parent=19 // pred_check
          %p509 = pneg %p304
        $region58: #{tpu_custom_call.1} parent=19 // pred_check_branch
          %511 = sbr.rel (%p509) target = $region60
        $region59: #{tpu_custom_call.1} parent=19 // pred_region
          %s512 = sand.u32 %s29, 1
          %s513 = scalar_lea.sflag [#allocation13], %s512
          %s514 = sand.u32 %s294, 1
          %s515 = smul.addr %s514, 256
          %s516 = scalar_lea.vmem [#allocation14], %s515
          %s518 = ssub.s32 4096, 4096
          %519 = vsyncadd %s513, %s518
          %s520 = smul.addr %s29, 64
          %s521 = smul.addr %s520, 64
          %s522 = scalar_lea.hbm %s10, %s521
          %s523 = sshll.u32 %s516, 4
          %s524 = int_to_ptr.vmem [resolvable:$true] %s523
          %529 = dma.hbm_to_vmem [thread:$0]  %s522, 4096, %s524, %s513, 64, 64, 4
        $region60: #{tpu_custom_call.1} parent=19 // pred_fallthru
          _
        // Predicated region
        $region61: #{tpu_custom_call.1} parent=19 // pred_check
          %p530 = pneg %p330
        $region62: #{tpu_custom_call.1} parent=19 // pred_check_branch
          %532 = sbr.rel (%p530) target = $region64
        $region63: #{tpu_custom_call.1} parent=19 // pred_region
          %p533 = scmp.lt.s32.totalorder %s29, 2
          %s534 = scalar_select %p533, %s29, 2
          %s535 = scalar_lea.vmem %s11, %s534
        $region64: #{tpu_custom_call.1} parent=19 // pred_fallthru
          _
      $region20: #{tpu_custom_call.1} parent=5 // pred_fallthru
        _
      %p536 = scmp.le.s32.totalorder 1, %s29
      %p537 = scmp.lt.s32.totalorder %s29, 4
      %p538 = pnand %p536, %p537
      %p539 = pneg %p538
      // Predicated region
      $region65: #{tpu_custom_call.1} parent=5 // pred_check
        _
      $region66: #{tpu_custom_call.1} parent=5 // pred_check_branch
        %541 = sbr.rel (%p538) target = $region68
      $region67: #{tpu_custom_call.1} parent=5 // pred_region
        %s542 = ssub.s32 %s29, 1
        // Predicated region
        $region69: #{tpu_custom_call.1} parent=67 // pred_check
          %p543 = pneg %p50
        $region70: #{tpu_custom_call.1} parent=67 // pred_check_branch
          %545 = sbr.rel (%p543) target = $region72
        $region71: #{tpu_custom_call.1} parent=67 // pred_region
          %546 = dma.done [#allocation4], 128
        $region72: #{tpu_custom_call.1} parent=67 // pred_fallthru
          _
        %s547 = sand.u32 %s34, 1
        %s548 = scalar_lea.sflag [#allocation7], %s547
        %s549 = sand.u32 %s115, 1
        %s550 = smul.addr %s549, 384
        %s551 = scalar_lea.vmem [#allocation6], %s550
        // Predicated region
        $region73: #{tpu_custom_call.1} parent=67 // pred_check
          %p552 = pneg %p128
        $region74: #{tpu_custom_call.1} parent=67 // pred_check_branch
          %554 = sbr.rel (%p552) target = $region76
        $region75: #{tpu_custom_call.1} parent=67 // pred_region
          %555 = dma.done %s548, 6144
        $region76: #{tpu_custom_call.1} parent=67 // pred_fallthru
          _
        %s556 = sand.u32 %s34, 1
        %s557 = scalar_lea.sflag [#allocation7], %s556
        %s558 = sand.u32 %s141, 1
        %s559 = smul.addr %s558, 128
        %s560 = scalar_lea.vmem [#allocation8], %s559
        // Predicated region
        $region77: #{tpu_custom_call.1} parent=67 // pred_check
          %p561 = pneg %p154
        $region78: #{tpu_custom_call.1} parent=67 // pred_check_branch
          %563 = sbr.rel (%p561) target = $region80
        $region79: #{tpu_custom_call.1} parent=67 // pred_region
          %564 = dma.done %s557, 2048
        $region80: #{tpu_custom_call.1} parent=67 // pred_fallthru
          _
        %s565 = sand.u32 %s34, 1
        %s566 = scalar_lea.sflag [#allocation10], %s565
        %s567 = sand.u32 %s193, 1
        %s568 = scalar_lea.vmem [#allocation9], %s567
        // Predicated region
        $region81: #{tpu_custom_call.1} parent=67 // pred_check
          %p569 = pneg %p206
        $region82: #{tpu_custom_call.1} parent=67 // pred_check_branch
          %571 = sbr.rel (%p569) target = $region84
        $region83: #{tpu_custom_call.1} parent=67 // pred_region
          %572 = dma.done %s566, 16
        $region84: #{tpu_custom_call.1} parent=67 // pred_fallthru
          _
        %s573 = sand.u32 %s34, 1
        %s574 = scalar_lea.sflag [#allocation10], %s573
        %s575 = sand.u32 %s219, 1
        %s576 = scalar_lea.vmem [#allocation11], %s575
        // Predicated region
        $region85: #{tpu_custom_call.1} parent=67 // pred_check
          %p577 = pneg %p232
        $region86: #{tpu_custom_call.1} parent=67 // pred_check_branch
          %579 = sbr.rel (%p577) target = $region88
        $region87: #{tpu_custom_call.1} parent=67 // pred_region
          %580 = dma.done %s574, 16
        $region88: #{tpu_custom_call.1} parent=67 // pred_fallthru
          _
        %s581 = sand.u32 %s34, 1
        %s582 = scalar_lea.sflag [#allocation13], %s581
        %s583 = sand.u32 %s245, 1
        %s584 = smul.addr %s583, 512
        %s585 = scalar_lea.vmem [#allocation12], %s584
        // Predicated region
        $region89: #{tpu_custom_call.1} parent=67 // pred_check
          %p586 = pneg %p258
        $region90: #{tpu_custom_call.1} parent=67 // pred_check_branch
          %588 = sbr.rel (%p586) target = $region92
        $region91: #{tpu_custom_call.1} parent=67 // pred_region
          %589 = dma.done %s582, 8192
        $region92: #{tpu_custom_call.1} parent=67 // pred_fallthru
          _
        %s590 = sand.u32 %s34, 1
        %s591 = scalar_lea.sflag [#allocation13], %s590
        %s592 = sand.u32 %s297, 1
        %s593 = smul.addr %s592, 256
        %s594 = scalar_lea.vmem [#allocation14], %s593
        // Predicated region
        $region93: #{tpu_custom_call.1} parent=67 // pred_check
          %p595 = pneg %p310
        $region94: #{tpu_custom_call.1} parent=67 // pred_check_branch
          %597 = sbr.rel (%p595) target = $region96
        $region95: #{tpu_custom_call.1} parent=67 // pred_region
          %598 = dma.done %s591, 4096
        $region96: #{tpu_custom_call.1} parent=67 // pred_fallthru
          _
        %p599 = pneg %p50
        %p600 = pneg %p47
        %p601 = scmp.lt.s32.totalorder %s34, 2
        %s602 = scalar_select %p601, %s34, 2
        %s603 = scalar_lea.vmem %s1, %s602
        %p604 = pneg %p76
        %p605 = pneg %p73
        %p606 = scmp.lt.s32.totalorder %s34, 2
        %s607 = scalar_select %p606, %s34, 2
        %s608 = scalar_lea.vmem %s2, %s607
        %p609 = pneg %p102
        %p610 = pneg %p99
        %s611 = sand.u32 %s34, 1
        %s612 = scalar_lea.sflag [#allocation7], %s611
        %s613 = sand.u32 %s115, 1
        %s614 = smul.addr %s613, 384
        %s615 = scalar_lea.vmem [#allocation6], %s614
        %p616 = pneg %p128
        %p617 = pneg %p125
        %s618 = sand.u32 %s34, 1
        %s619 = scalar_lea.sflag [#allocation7], %s618
        %s620 = sand.u32 %s141, 1
        %s621 = smul.addr %s620, 128
        %s622 = scalar_lea.vmem [#allocation8], %s621
        %p623 = pneg %p154
        %p624 = pneg %p151
        %p625 = scmp.lt.s32.totalorder %s34, 2
        %s626 = scalar_select %p625, %s34, 2
        %s627 = scalar_lea.vmem %s5, %s626
        %p628 = pneg %p180
        %p629 = pneg %p177
        %s630 = sand.u32 %s34, 1
        %s631 = scalar_lea.sflag [#allocation10], %s630
        %s632 = sand.u32 %s193, 1
        %s633 = scalar_lea.vmem [#allocation9], %s632
        %p634 = pneg %p206
        %p635 = pneg %p203
        %s636 = sand.u32 %s34, 1
        %s637 = scalar_lea.sflag [#allocation10], %s636
        %s638 = sand.u32 %s219, 1
        %s639 = scalar_lea.vmem [#allocation11], %s638
        %p640 = pneg %p232
        %p641 = pneg %p229
        %s642 = sand.u32 %s34, 1
        %s643 = scalar_lea.sflag [#allocation13], %s642
        %s644 = sand.u32 %s245, 1
        %s645 = smul.addr %s644, 512
        %s646 = scalar_lea.vmem [#allocation12], %s645
        %p647 = pneg %p258
        %p648 = pneg %p255
        %p649 = scmp.lt.s32.totalorder %s34, 2
        %s650 = scalar_select %p649, %s34, 2
        %s651 = smul.addr %s650, 8
        %s652 = scalar_lea.vmem %s9, %s651
        %p653 = pneg %p284
        %p654 = pneg %p281
        %s655 = sand.u32 %s34, 1
        %s656 = scalar_lea.sflag [#allocation13], %s655
        %s657 = sand.u32 %s297, 1
        %s658 = smul.addr %s657, 256
        %s659 = scalar_lea.vmem [#allocation14], %s658
        %p660 = pneg %p310
        %p661 = pneg %p307
        %p662 = scmp.lt.s32.totalorder %s34, 2
        %s663 = scalar_select %p662, %s34, 2
        %s664 = scalar_lea.vmem %s11, %s663
        %p665 = pneg %p336
        %p666 = pneg %p333
        %p667 = pneg %p357
        %p668 = pneg %p354
        %p669 = scmp.lt.s32.totalorder %s34, 2
        %s670 = scalar_select %p669, %s34, 2
        %s671 = scalar_lea.vmem %s1, %s670
        %p672 = scmp.lt.s32.totalorder %s34, 2
        %s673 = scalar_select %p672, %s34, 2
        %s674 = scalar_lea.vmem %s2, %s673
        %p675 = scmp.lt.s32.totalorder %s34, 2
        %s676 = scalar_select %p675, %s34, 2
        %s677 = scalar_lea.vmem %s5, %s676
        %p678 = scmp.lt.s32.totalorder %s34, 2
        %s679 = scalar_select %p678, %s34, 2
        %s680 = smul.addr %s679, 8
        %s681 = scalar_lea.vmem %s9, %s680
        %p682 = scmp.lt.s32.totalorder %s34, 2
        %s683 = scalar_select %p682, %s34, 2
        %s684 = scalar_lea.vmem %s11, %s683
        %p686 = scmp.eq.s32.totalorder %s34, 0
        // Predicated region
        $region97: #{tpu_custom_call.1} parent=67 // pred_check
          %p687 = pneg %p686
        $region98: #{tpu_custom_call.1} parent=67 // pred_check_branch
          %689 = sbr.rel (%p687) target = $region100
        $region99: #{tpu_custom_call.1} parent=67 // pred_region
          %v690 = vld [vmem:[#allocation3] sm:$0xff]
          %691 = vst [vmem:[#allocation2] sm:$0xff] %v690
        $region100: #{tpu_custom_call.1} parent=67 // pred_fallthru
          _
        %v692 = vld [vmem:[#allocation2] sm:$0xff]
        %v693 = vld [vmem:[%s671] sm:$0x1]
        %v694 = vld [vmem:[%s674] sm:$0x1]
        %695 = vadd.xlane.f32.xlu0 %v692
        %v696 = vpop.xlane.xlu0 %695
        %v697 = vrcp.pop 128.0
        %v698 = vmul.f32 %v696, %v697
        %v699 = vsub.f32 %v692, %v698
        %v700 = vmul.f32 %v699, %v699
        %701 = vadd.xlane.f32.xlu0 %v700
        %v702 = vpop.xlane.xlu0 %701
        %v703 = vmul.f32 %v702, %v697
        %v704 = vadd.f32 %v703, 1e-05
        %v705 = vrsqrt.pop %v704
        %v706 = vmul.f32 %v699, %v705
        %v708 = vlaneseq
        %v709 = vshrl.u32 %v708, 7
        %v710 = vsub.s32 0, %v709
        %v711 = vrot.slane %v693, %v710
        %v713 = vmul.f32 %v706, %v711
        %v715 = vlaneseq
        %v716 = vshrl.u32 %v715, 7
        %v717 = vsub.s32 0, %v716
        %v718 = vrot.slane %v694, %v717
        %v720 = vadd.f32 %v713, %v718
        %v721 = vpack.c.bf16 %v720, %v720
        %v722 = vld [vmem:[%s551] sm:$0xff]
        %v723 = vld [vmem:[%s551 + $0x8] sm:$0xff]
        %v724 = vld [vmem:[%s551 + $0x10] sm:$0xff]
        %v725 = vld [vmem:[%s551 + $0x18] sm:$0xff]
        %v726 = vld [vmem:[%s551 + $0x20] sm:$0xff]
        %v727 = vld [vmem:[%s551 + $0x28] sm:$0xff]
        %v728 = vld [vmem:[%s551 + $0x30] sm:$0xff]
        %v729 = vld [vmem:[%s551 + $0x38] sm:$0xff]
        %v730 = vld [vmem:[%s551 + $0x40] sm:$0xff]
        %v731 = vld [vmem:[%s551 + $0x48] sm:$0xff]
        %v732 = vld [vmem:[%s551 + $0x50] sm:$0xff]
        %v733 = vld [vmem:[%s551 + $0x58] sm:$0xff]
        %v734 = vld [vmem:[%s551 + $0x60] sm:$0xff]
        %v735 = vld [vmem:[%s551 + $0x68] sm:$0xff]
        %v736 = vld [vmem:[%s551 + $0x70] sm:$0xff]
        %v737 = vld [vmem:[%s551 + $0x78] sm:$0xff]
        %v738 = vld [vmem:[%s551 + $0x80] sm:$0xff]
        %v739 = vld [vmem:[%s551 + $0x88] sm:$0xff]
        %v740 = vld [vmem:[%s551 + $0x90] sm:$0xff]
        %v741 = vld [vmem:[%s551 + $0x98] sm:$0xff]
        %v742 = vld [vmem:[%s551 + $0xa0] sm:$0xff]
        %v743 = vld [vmem:[%s551 + $0xa8] sm:$0xff]
        %v744 = vld [vmem:[%s551 + $0xb0] sm:$0xff]
        %v745 = vld [vmem:[%s551 + $0xb8] sm:$0xff]
        %v746 = vld [vmem:[%s551 + $0xc0] sm:$0xff]
        %v747 = vld [vmem:[%s551 + $0xc8] sm:$0xff]
        %v748 = vld [vmem:[%s551 + $0xd0] sm:$0xff]
        %v749 = vld [vmem:[%s551 + $0xd8] sm:$0xff]
        %v750 = vld [vmem:[%s551 + $0xe0] sm:$0xff]
        %v751 = vld [vmem:[%s551 + $0xe8] sm:$0xff]
        %v752 = vld [vmem:[%s551 + $0xf0] sm:$0xff]
        %v753 = vld [vmem:[%s551 + $0xf8] sm:$0xff]
        %v754 = vld [vmem:[%s551 + $0x100] sm:$0xff]
        %v755 = vld [vmem:[%s551 + $0x108] sm:$0xff]
        %v756 = vld [vmem:[%s551 + $0x110] sm:$0xff]
        %v757 = vld [vmem:[%s551 + $0x118] sm:$0xff]
        %v758 = vld [vmem:[%s551 + $0x120] sm:$0xff]
        %v759 = vld [vmem:[%s551 + $0x128] sm:$0xff]
        %v760 = vld [vmem:[%s551 + $0x130] sm:$0xff]
        %v761 = vld [vmem:[%s551 + $0x138] sm:$0xff]
        %v762 = vld [vmem:[%s551 + $0x140] sm:$0xff]
        %v763 = vld [vmem:[%s551 + $0x148] sm:$0xff]
        %v764 = vld [vmem:[%s551 + $0x150] sm:$0xff]
        %v765 = vld [vmem:[%s551 + $0x158] sm:$0xff]
        %v766 = vld [vmem:[%s551 + $0x160] sm:$0xff]
        %v767 = vld [vmem:[%s551 + $0x168] sm:$0xff]
        %v768 = vld [vmem:[%s551 + $0x170] sm:$0xff]
        %v769 = vld [vmem:[%s551 + $0x178] sm:$0xff]
        %v818 = vunpack.c.l.b16 %v722
        %v819 = vunpack.c.h.b16 %v722
        %v820 = vunpack.c.l.b16 %v723
        %v821 = vunpack.c.h.b16 %v723
        %v822 = vunpack.c.l.b16 %v724
        %v823 = vunpack.c.h.b16 %v724
        %v824 = vunpack.c.l.b16 %v725
        %v825 = vunpack.c.h.b16 %v725
        %v826 = vunpack.c.l.b16 %v726
        %v827 = vunpack.c.h.b16 %v726
        %v828 = vunpack.c.l.b16 %v727
        %v829 = vunpack.c.h.b16 %v727
        %v830 = vunpack.c.l.b16 %v728
        %v831 = vunpack.c.h.b16 %v728
        %v832 = vunpack.c.l.b16 %v729
        %v833 = vunpack.c.h.b16 %v729
        %v834 = vunpack.c.l.b16 %v730
        %v835 = vunpack.c.h.b16 %v730
        %v836 = vunpack.c.l.b16 %v731
        %v837 = vunpack.c.h.b16 %v731
        %v838 = vunpack.c.l.b16 %v732
        %v839 = vunpack.c.h.b16 %v732
        %v840 = vunpack.c.l.b16 %v733
        %v841 = vunpack.c.h.b16 %v733
        %v842 = vunpack.c.l.b16 %v734
        %v843 = vunpack.c.h.b16 %v734
        %v844 = vunpack.c.l.b16 %v735
        %v845 = vunpack.c.h.b16 %v735
        %v846 = vunpack.c.l.b16 %v736
        %v847 = vunpack.c.h.b16 %v736
        %v848 = vunpack.c.l.b16 %v737
        %v849 = vunpack.c.h.b16 %v737
        %v850 = vunpack.c.l.b16 %v738
        %v851 = vunpack.c.h.b16 %v738
        %v852 = vunpack.c.l.b16 %v739
        %v853 = vunpack.c.h.b16 %v739
        %v854 = vunpack.c.l.b16 %v740
        %v855 = vunpack.c.h.b16 %v740
        %v856 = vunpack.c.l.b16 %v741
        %v857 = vunpack.c.h.b16 %v741
        %v858 = vunpack.c.l.b16 %v742
        %v859 = vunpack.c.h.b16 %v742
        %v860 = vunpack.c.l.b16 %v743
        %v861 = vunpack.c.h.b16 %v743
        %v862 = vunpack.c.l.b16 %v744
        %v863 = vunpack.c.h.b16 %v744
        %v864 = vunpack.c.l.b16 %v745
        %v865 = vunpack.c.h.b16 %v745
        %v866 = vunpack.c.l.b16 %v746
        %v867 = vunpack.c.h.b16 %v746
        %v868 = vunpack.c.l.b16 %v747
        %v869 = vunpack.c.h.b16 %v747
        %v870 = vunpack.c.l.b16 %v748
        %v871 = vunpack.c.h.b16 %v748
        %v872 = vunpack.c.l.b16 %v749
        %v873 = vunpack.c.h.b16 %v749
        %v874 = vunpack.c.l.b16 %v750
        %v875 = vunpack.c.h.b16 %v750
        %v876 = vunpack.c.l.b16 %v751
        %v877 = vunpack.c.h.b16 %v751
        %v878 = vunpack.c.l.b16 %v752
        %v879 = vunpack.c.h.b16 %v752
        %v880 = vunpack.c.l.b16 %v753
        %v881 = vunpack.c.h.b16 %v753
        %v882 = vunpack.c.l.b16 %v754
        %v883 = vunpack.c.h.b16 %v754
        %v884 = vunpack.c.l.b16 %v755
        %v885 = vunpack.c.h.b16 %v755
        %v886 = vunpack.c.l.b16 %v756
        %v887 = vunpack.c.h.b16 %v756
        %v888 = vunpack.c.l.b16 %v757
        %v889 = vunpack.c.h.b16 %v757
        %v890 = vunpack.c.l.b16 %v758
        %v891 = vunpack.c.h.b16 %v758
        %v892 = vunpack.c.l.b16 %v759
        %v893 = vunpack.c.h.b16 %v759
        %v894 = vunpack.c.l.b16 %v760
        %v895 = vunpack.c.h.b16 %v760
        %v896 = vunpack.c.l.b16 %v761
        %v897 = vunpack.c.h.b16 %v761
        %v898 = vunpack.c.l.b16 %v762
        %v899 = vunpack.c.h.b16 %v762
        %v900 = vunpack.c.l.b16 %v763
        %v901 = vunpack.c.h.b16 %v763
        %v902 = vunpack.c.l.b16 %v764
        %v903 = vunpack.c.h.b16 %v764
        %v904 = vunpack.c.l.b16 %v765
        %v905 = vunpack.c.h.b16 %v765
        %v906 = vunpack.c.l.b16 %v766
        %v907 = vunpack.c.h.b16 %v766
        %v908 = vunpack.c.l.b16 %v767
        %v909 = vunpack.c.h.b16 %v767
        %v910 = vunpack.c.l.b16 %v768
        %v911 = vunpack.c.h.b16 %v768
        %v912 = vunpack.c.l.b16 %v769
        %v913 = vunpack.c.h.b16 %v769
        %v914 = vpack.c.b16 %v824, %v818
        %v915 = vpack.c.b16 %v825, %v819
        %v916 = vpack.c.b16 %v826, %v820
        %v917 = vpack.c.b16 %v827, %v821
        %v918 = vpack.c.b16 %v828, %v822
        %v919 = vpack.c.b16 %v829, %v823
        %v920 = vpack.c.b16 %v836, %v830
        %v921 = vpack.c.b16 %v837, %v831
        %v922 = vpack.c.b16 %v838, %v832
        %v923 = vpack.c.b16 %v839, %v833
        %v924 = vpack.c.b16 %v840, %v834
        %v925 = vpack.c.b16 %v841, %v835
        %v926 = vpack.c.b16 %v848, %v842
        %v927 = vpack.c.b16 %v849, %v843
        %v928 = vpack.c.b16 %v850, %v844
        %v929 = vpack.c.b16 %v851, %v845
        %v930 = vpack.c.b16 %v852, %v846
        %v931 = vpack.c.b16 %v853, %v847
        %v932 = vpack.c.b16 %v860, %v854
        %v933 = vpack.c.b16 %v861, %v855
        %v934 = vpack.c.b16 %v862, %v856
        %v935 = vpack.c.b16 %v863, %v857
        %v936 = vpack.c.b16 %v864, %v858
        %v937 = vpack.c.b16 %v865, %v859
        %v938 = vpack.c.b16 %v872, %v866
        %v939 = vpack.c.b16 %v873, %v867
        %v940 = vpack.c.b16 %v874, %v868
        %v941 = vpack.c.b16 %v875, %v869
        %v942 = vpack.c.b16 %v876, %v870
        %v943 = vpack.c.b16 %v877, %v871
        %v944 = vpack.c.b16 %v884, %v878
        %v945 = vpack.c.b16 %v885, %v879
        %v946 = vpack.c.b16 %v886, %v880
        %v947 = vpack.c.b16 %v887, %v881
        %v948 = vpack.c.b16 %v888, %v882
        %v949 = vpack.c.b16 %v889, %v883
        %v950 = vpack.c.b16 %v896, %v890
        %v951 = vpack.c.b16 %v897, %v891
        %v952 = vpack.c.b16 %v898, %v892
        %v953 = vpack.c.b16 %v899, %v893
        %v954 = vpack.c.b16 %v900, %v894
        %v955 = vpack.c.b16 %v901, %v895
        %v956 = vpack.c.b16 %v908, %v902
        %v957 = vpack.c.b16 %v909, %v903
        %v958 = vpack.c.b16 %v910, %v904
        %v959 = vpack.c.b16 %v911, %v905
        %v960 = vpack.c.b16 %v912, %v906
        %v961 = vpack.c.b16 %v913, %v907
        %1010 = vmatprep.subr.bf16.mxu0 %v915
        %1011 = vmatpush1.bf16.msra.mxu0 %v914
        %1012 = vmatprep.subr.bf16.mxu0 %v921
        %1013 = vmatpush1.bf16.msra.mxu0 %v920
        %1014 = vmatprep.subr.bf16.mxu0 %v927
        %1015 = vmatpush1.bf16.msra.mxu0 %v926
        %1016 = vmatprep.subr.bf16.mxu0 %v933
        %1017 = vmatpush1.bf16.msra.mxu0 %v932
        %1018 = vmatprep.subr.bf16.mxu0 %v939
        %1019 = vmatpush1.bf16.msra.mxu0 %v938
        %1020 = vmatprep.subr.bf16.mxu0 %v945
        %1021 = vmatpush1.bf16.msra.mxu0 %v944
        %1022 = vmatprep.subr.bf16.mxu0 %v951
        %1023 = vmatpush1.bf16.msra.mxu0 %v950
        %1024 = vmatprep.subr.bf16.mxu0 %v957
        %1025 = vmatpush1.bf16.msra.mxu0 %v956
        %1026 = vmatprep.subr.bf16.mxu0 0
        %1027 = vmatpush1.bf16.msra.mxu0 0
        %1028 = vmatprep.subr.bf16.mxu0 0
        %1029 = vmatpush1.bf16.msra.mxu0 0
        %1030 = vmatprep.subr.bf16.mxu0 0
        %1031 = vmatpush1.bf16.msra.mxu0 0
        %1032 = vmatprep.subr.bf16.mxu0 0
        %1033 = vmatpush1.bf16.msra.mxu0 0
        %1034 = vmatprep.subr.bf16.mxu0 0
        %1035 = vmatpush1.bf16.msra.mxu0 0
        %1036 = vmatprep.subr.bf16.mxu0 0
        %1037 = vmatpush1.bf16.msra.mxu0 0
        %1038 = vmatprep.subr.bf16.mxu0 0
        %1039 = vmatpush1.bf16.msra.mxu0 0
        %1040 = vmatprep.subr.bf16.mxu0 0
        %1041 = vmatpush1.bf16.msra.mxu0 0
        %1042 = vmatprep.mubr.bf16.mxu0 0
        %1043 = vmatmul.mubr.bf16.gmra.mrb[0].mxu0 %v721
        %v1044 = vpop.f32.mrb[0].mxu0
        %v1045 = vadd.f32 0.0, %v1044
        %v1046 = vpop.f32.mrb[0].mxu0
        %v1047 = vadd.f32 0.0, %v1046
        %v1048 = vpop.f32.mrb[0].mxu0
        %v1049 = vpop.f32.mrb[0].mxu0
        %1050 = vdwg.mxu0
        %1051 = vmatprep.subr.bf16.mxu0 %v917
        %1052 = vmatpush1.bf16.msra.mxu0 %v916
        %1053 = vmatprep.subr.bf16.mxu0 %v923
        %1054 = vmatpush1.bf16.msra.mxu0 %v922
        %1055 = vmatprep.subr.bf16.mxu0 %v929
        %1056 = vmatpush1.bf16.msra.mxu0 %v928
        %1057 = vmatprep.subr.bf16.mxu0 %v935
        %1058 = vmatpush1.bf16.msra.mxu0 %v934
        %1059 = vmatprep.subr.bf16.mxu0 %v941
        %1060 = vmatpush1.bf16.msra.mxu0 %v940
        %1061 = vmatprep.subr.bf16.mxu0 %v947
        %1062 = vmatpush1.bf16.msra.mxu0 %v946
        %1063 = vmatprep.subr.bf16.mxu0 %v953
        %1064 = vmatpush1.bf16.msra.mxu0 %v952
        %1065 = vmatprep.subr.bf16.mxu0 %v959
        %1066 = vmatpush1.bf16.msra.mxu0 %v958
        %1067 = vmatprep.subr.bf16.mxu0 0
        %1068 = vmatpush1.bf16.msra.mxu0 0
        %1069 = vmatprep.subr.bf16.mxu0 0
        %1070 = vmatpush1.bf16.msra.mxu0 0
        %1071 = vmatprep.subr.bf16.mxu0 0
        %1072 = vmatpush1.bf16.msra.mxu0 0
        %1073 = vmatprep.subr.bf16.mxu0 0
        %1074 = vmatpush1.bf16.msra.mxu0 0
        %1075 = vmatprep.subr.bf16.mxu0 0
        %1076 = vmatpush1.bf16.msra.mxu0 0
        %1077 = vmatprep.subr.bf16.mxu0 0
        %1078 = vmatpush1.bf16.msra.mxu0 0
        %1079 = vmatprep.subr.bf16.mxu0 0
        %1080 = vmatpush1.bf16.msra.mxu0 0
        %1081 = vmatprep.subr.bf16.mxu0 0
        %1082 = vmatpush1.bf16.msra.mxu0 0
        %1083 = vmatprep.mubr.bf16.mxu0 0
        %1084 = vmatmul.mubr.bf16.gmra.mrb[0].mxu0 %v721
        %v1085 = vpop.f32.mrb[0].mxu0
        %v1086 = vadd.f32 0.0, %v1085
        %v1087 = vpop.f32.mrb[0].mxu0
        %v1088 = vadd.f32 0.0, %v1087
        %v1089 = vpop.f32.mrb[0].mxu0
        %v1090 = vpop.f32.mrb[0].mxu0
        %1091 = vdwg.mxu0
        %1092 = vmatprep.subr.bf16.mxu0 %v919
        %1093 = vmatpush1.bf16.msra.mxu0 %v918
        %1094 = vmatprep.subr.bf16.mxu0 %v925
        %1095 = vmatpush1.bf16.msra.mxu0 %v924
        %1096 = vmatprep.subr.bf16.mxu0 %v931
        %1097 = vmatpush1.bf16.msra.mxu0 %v930
        %1098 = vmatprep.subr.bf16.mxu0 %v937
        %1099 = vmatpush1.bf16.msra.mxu0 %v936
        %1100 = vmatprep.subr.bf16.mxu0 %v943
        %1101 = vmatpush1.bf16.msra.mxu0 %v942
        %1102 = vmatprep.subr.bf16.mxu0 %v949
        %1103 = vmatpush1.bf16.msra.mxu0 %v948
        %1104 = vmatprep.subr.bf16.mxu0 %v955
        %1105 = vmatpush1.bf16.msra.mxu0 %v954
        %1106 = vmatprep.subr.bf16.mxu0 %v961
        %1107 = vmatpush1.bf16.msra.mxu0 %v960
        %1108 = vmatprep.subr.bf16.mxu0 0
        %1109 = vmatpush1.bf16.msra.mxu0 0
        %1110 = vmatprep.subr.bf16.mxu0 0
        %1111 = vmatpush1.bf16.msra.mxu0 0
        %1112 = vmatprep.subr.bf16.mxu0 0
        %1113 = vmatpush1.bf16.msra.mxu0 0
        %1114 = vmatprep.subr.bf16.mxu0 0
        %1115 = vmatpush1.bf16.msra.mxu0 0
        %1116 = vmatprep.subr.bf16.mxu0 0
        %1117 = vmatpush1.bf16.msra.mxu0 0
        %1118 = vmatprep.subr.bf16.mxu0 0
        %1119 = vmatpush1.bf16.msra.mxu0 0
        %1120 = vmatprep.subr.bf16.mxu0 0
        %1121 = vmatpush1.bf16.msra.mxu0 0
        %1122 = vmatprep.subr.bf16.mxu0 0
        %1123 = vmatpush1.bf16.msra.mxu0 0
        %1124 = vmatprep.mubr.bf16.mxu0 0
        %1125 = vmatmul.mubr.bf16.gmra.mrb[0].mxu0 %v721
        %v1126 = vpop.f32.mrb[0].mxu0
        %v1127 = vadd.f32 0.0, %v1126
        %v1128 = vpop.f32.mrb[0].mxu0
        %v1129 = vadd.f32 0.0, %v1128
        %v1130 = vpop.f32.mrb[0].mxu0
        %v1131 = vpop.f32.mrb[0].mxu0
        %1132 = vdwg.mxu0
        %v1133 = vpack.c.bf16 %v1045, %v1045
        %v1134 = vpack.c.bf16 %v1086, %v1086
        %v1135 = vpack.c.bf16 %v1127, %v1127
        %vm1136 = vcmask 523264
        %v1138 = vsel %vm1136, %v1133, 0
        %v1141 = vsel %vm1136, %v1134, 0
        %1143 = vmatprep.subr.bf16.mxu0 0
        %1144 = vmatpush1.bf16.xpose.msra.mxu0 %v1141
        %1145 = vmatprep.subr.bf16.mxu0 0
        %1146 = vmatpush1.bf16.xpose.msra.mxu0 0
        %1147 = vmatprep.subr.bf16.mxu0 0
        %1148 = vmatpush1.bf16.xpose.msra.mxu0 0
        %1149 = vmatprep.subr.bf16.mxu0 0
        %1150 = vmatpush1.bf16.xpose.msra.mxu0 0
        %1151 = vmatprep.subr.bf16.mxu0 0
        %1152 = vmatpush1.bf16.xpose.msra.mxu0 0
        %1153 = vmatprep.subr.bf16.mxu0 0
        %1154 = vmatpush1.bf16.xpose.msra.mxu0 0
        %1155 = vmatprep.subr.bf16.mxu0 0
        %1156 = vmatpush1.bf16.xpose.msra.mxu0 0
        %1157 = vmatprep.subr.bf16.mxu0 0
        %1158 = vmatpush1.bf16.xpose.msra.mxu0 0
        %1159 = vmatprep.subr.bf16.mxu0 0
        %1160 = vmatpush1.bf16.xpose.msra.mxu0 0
        %1161 = vmatprep.subr.bf16.mxu0 0
        %1162 = vmatpush1.bf16.xpose.msra.mxu0 0
        %1163 = vmatprep.subr.bf16.mxu0 0
        %1164 = vmatpush1.bf16.xpose.msra.mxu0 0
        %1165 = vmatprep.subr.bf16.mxu0 0
        %1166 = vmatpush1.bf16.xpose.msra.mxu0 0
        %1167 = vmatprep.subr.bf16.mxu0 0
        %1168 = vmatpush1.bf16.xpose.msra.mxu0 0
        %1169 = vmatprep.subr.bf16.mxu0 0
        %1170 = vmatpush1.bf16.xpose.msra.mxu0 0
        %1171 = vmatprep.subr.bf16.mxu0 0
        %1172 = vmatpush1.bf16.xpose.msra.mxu0 0
        %1173 = vmatprep.subr.bf16.mxu0 0
        %1174 = vmatpush1.bf16.xpose.msra.mxu0 0
        %1175 = vmatprep.mubr.bf16.mxu0 0
        %1176 = vmatmul.mubr.bf16.gmra.mrb[0].mxu0 %v1138
        %v1177 = vpop.f32.mrb[0].mxu0
        %v1178 = vadd.f32 0.0, %v1177
        %v1179 = vpop.f32.mrb[0].mxu0
        %v1180 = vpop.f32.mrb[0].mxu0
        %v1181 = vpop.f32.mrb[0].mxu0
        %1182 = vdwg.mxu0
        %vm1183 = vcmask 64512
        %v1184 = vsel %vm1183, %v1178, -inf
        %1185 = vmax.xlane.f32.xlu0 %v1184
        %v1186 = vpop.xlane.xlu0 %1185
        %v1187 = vsub.f32 %v1178, %v1186
        %v1188 = vmul.f32 %v1187, 1.442695
        %v1189 = vpow.pop %v1188
        %v1190 = vsel %vm1183, %v1189, 0.0
        %1191 = vadd.xlane.f32.xlu0 %v1190
        %v1192 = vpop.xlane.xlu0 %1191
        %v1193 = vrcp.pop %v1192
        %v1194 = vmul.f32 %v1189, %v1193
        %v1195 = vpack.c.bf16 %v1194, %v1194
        %v1197 = vsel %vm1183, %v1195, 0
        %vm1199 = vcmask 1043456
        %v1201 = vsel %vm1199, %v1135, 0
        %1203 = vmatprep.subr.bf16.mxu0 0
        %1204 = vmatpush1.bf16.msra.mxu0 %v1201
        %1205 = vmatprep.subr.bf16.mxu0 0
        %1206 = vmatpush1.bf16.msra.mxu0 0
        %1207 = vmatprep.subr.bf16.mxu0 0
        %1208 = vmatpush1.bf16.msra.mxu0 0
        %1209 = vmatprep.subr.bf16.mxu0 0
        %1210 = vmatpush1.bf16.msra.mxu0 0
        %1211 = vmatprep.subr.bf16.mxu0 0
        %1212 = vmatpush1.bf16.msra.mxu0 0
        %1213 = vmatprep.subr.bf16.mxu0 0
        %1214 = vmatpush1.bf16.msra.mxu0 0
        %1215 = vmatprep.subr.bf16.mxu0 0
        %1216 = vmatpush1.bf16.msra.mxu0 0
        %1217 = vmatprep.subr.bf16.mxu0 0
        %1218 = vmatpush1.bf16.msra.mxu0 0
        %1219 = vmatprep.subr.bf16.mxu0 0
        %1220 = vmatpush1.bf16.msra.mxu0 0
        %1221 = vmatprep.subr.bf16.mxu0 0
        %1222 = vmatpush1.bf16.msra.mxu0 0
        %1223 = vmatprep.subr.bf16.mxu0 0
        %1224 = vmatpush1.bf16.msra.mxu0 0
        %1225 = vmatprep.subr.bf16.mxu0 0
        %1226 = vmatpush1.bf16.msra.mxu0 0
        %1227 = vmatprep.subr.bf16.mxu0 0
        %1228 = vmatpush1.bf16.msra.mxu0 0
        %1229 = vmatprep.subr.bf16.mxu0 0
        %1230 = vmatpush1.bf16.msra.mxu0 0
        %1231 = vmatprep.subr.bf16.mxu0 0
        %1232 = vmatpush1.bf16.msra.mxu0 0
        %1233 = vmatprep.subr.bf16.mxu0 0
        %1234 = vmatpush1.bf16.msra.mxu0 0
        %1235 = vmatprep.mubr.bf16.mxu0 0
        %1236 = vmatmul.mubr.bf16.gmra.mrb[0].mxu0 %v1197
        %v1237 = vpop.f32.mrb[0].mxu0
        %v1238 = vadd.f32 0.0, %v1237
        %v1239 = vpop.f32.mrb[0].mxu0
        %v1240 = vpop.f32.mrb[0].mxu0
        %v1241 = vpop.f32.mrb[0].mxu0
        %1242 = vdwg.mxu0
        %1244 = vrot.lane.b32.xlu0 %v1133, 64
        %v1245 = vpop.permute.xlu0 %1244
        %1247 = vrot.lane.b32.xlu0 %v1134, 64
        %v1248 = vpop.permute.xlu0 %1247
        %v1250 = vsel %vm1136, %v1245, 0
        %v1253 = vsel %vm1136, %v1248, 0
        %1255 = vmatprep.subr.bf16.mxu0 0
        %1256 = vmatpush1.bf16.xpose.msra.mxu0 %v1253
        %1257 = vmatprep.subr.bf16.mxu0 0
        %1258 = vmatpush1.bf16.xpose.msra.mxu0 0
        %1259 = vmatprep.subr.bf16.mxu0 0
        %1260 = vmatpush1.bf16.xpose.msra.mxu0 0
        %1261 = vmatprep.subr.bf16.mxu0 0
        %1262 = vmatpush1.bf16.xpose.msra.mxu0 0
        %1263 = vmatprep.subr.bf16.mxu0 0
        %1264 = vmatpush1.bf16.xpose.msra.mxu0 0
        %1265 = vmatprep.subr.bf16.mxu0 0
        %1266 = vmatpush1.bf16.xpose.msra.mxu0 0
        %1267 = vmatprep.subr.bf16.mxu0 0
        %1268 = vmatpush1.bf16.xpose.msra.mxu0 0
        %1269 = vmatprep.subr.bf16.mxu0 0
        %1270 = vmatpush1.bf16.xpose.msra.mxu0 0
        %1271 = vmatprep.subr.bf16.mxu0 0
        %1272 = vmatpush1.bf16.xpose.msra.mxu0 0
        %1273 = vmatprep.subr.bf16.mxu0 0
        %1274 = vmatpush1.bf16.xpose.msra.mxu0 0
        %1275 = vmatprep.subr.bf16.mxu0 0
        %1276 = vmatpush1.bf16.xpose.msra.mxu0 0
        %1277 = vmatprep.subr.bf16.mxu0 0
        %1278 = vmatpush1.bf16.xpose.msra.mxu0 0
        %1279 = vmatprep.subr.bf16.mxu0 0
        %1280 = vmatpush1.bf16.xpose.msra.mxu0 0
        %1281 = vmatprep.subr.bf16.mxu0 0
        %1282 = vmatpush1.bf16.xpose.msra.mxu0 0
        %1283 = vmatprep.subr.bf16.mxu0 0
        %1284 = vmatpush1.bf16.xpose.msra.mxu0 0
        %1285 = vmatprep.subr.bf16.mxu0 0
        %1286 = vmatpush1.bf16.xpose.msra.mxu0 0
        %1287 = vmatprep.mubr.bf16.mxu0 0
        %1288 = vmatmul.mubr.bf16.gmra.mrb[0].mxu0 %v1250
        %v1289 = vpop.f32.mrb[0].mxu0
        %v1290 = vadd.f32 0.0, %v1289
        %v1291 = vpop.f32.mrb[0].mxu0
        %v1292 = vpop.f32.mrb[0].mxu0
        %v1293 = vpop.f32.mrb[0].mxu0
        %1294 = vdwg.mxu0
        %v1295 = vsel %vm1183, %v1290, -inf
        %1296 = vmax.xlane.f32.xlu0 %v1295
        %v1297 = vpop.xlane.xlu0 %1296
        %v1298 = vsub.f32 %v1290, %v1297
        %v1299 = vmul.f32 %v1298, 1.442695
        %v1300 = vpow.pop %v1299
        %v1301 = vsel %vm1183, %v1300, 0.0
        %1302 = vadd.xlane.f32.xlu0 %v1301
        %v1303 = vpop.xlane.xlu0 %1302
        %v1304 = vrcp.pop %v1303
        %v1305 = vmul.f32 %v1300, %v1304
        %v1306 = vpack.c.bf16 %v1305, %v1305
        %1308 = vrot.lane.b32.xlu0 %v1135, 64
        %v1309 = vpop.permute.xlu0 %1308
        %v1311 = vsel %vm1183, %v1306, 0
        %v1314 = vsel %vm1199, %v1309, 0
        %1316 = vmatprep.subr.bf16.mxu0 0
        %1317 = vmatpush1.bf16.msra.mxu0 %v1314
        %1318 = vmatprep.subr.bf16.mxu0 0
        %1319 = vmatpush1.bf16.msra.mxu0 0
        %1320 = vmatprep.subr.bf16.mxu0 0
        %1321 = vmatpush1.bf16.msra.mxu0 0
        %1322 = vmatprep.subr.bf16.mxu0 0
        %1323 = vmatpush1.bf16.msra.mxu0 0
        %1324 = vmatprep.subr.bf16.mxu0 0
        %1325 = vmatpush1.bf16.msra.mxu0 0
        %1326 = vmatprep.subr.bf16.mxu0 0
        %1327 = vmatpush1.bf16.msra.mxu0 0
        %1328 = vmatprep.subr.bf16.mxu0 0
        %1329 = vmatpush1.bf16.msra.mxu0 0
        %1330 = vmatprep.subr.bf16.mxu0 0
        %1331 = vmatpush1.bf16.msra.mxu0 0
        %1332 = vmatprep.subr.bf16.mxu0 0
        %1333 = vmatpush1.bf16.msra.mxu0 0
        %1334 = vmatprep.subr.bf16.mxu0 0
        %1335 = vmatpush1.bf16.msra.mxu0 0
        %1336 = vmatprep.subr.bf16.mxu0 0
        %1337 = vmatpush1.bf16.msra.mxu0 0
        %1338 = vmatprep.subr.bf16.mxu0 0
        %1339 = vmatpush1.bf16.msra.mxu0 0
        %1340 = vmatprep.subr.bf16.mxu0 0
        %1341 = vmatpush1.bf16.msra.mxu0 0
        %1342 = vmatprep.subr.bf16.mxu0 0
        %1343 = vmatpush1.bf16.msra.mxu0 0
        %1344 = vmatprep.subr.bf16.mxu0 0
        %1345 = vmatpush1.bf16.msra.mxu0 0
        %1346 = vmatprep.subr.bf16.mxu0 0
        %1347 = vmatpush1.bf16.msra.mxu0 0
        %1348 = vmatprep.mubr.bf16.mxu0 0
        %1349 = vmatmul.mubr.bf16.gmra.mrb[0].mxu0 %v1311
        %v1350 = vpop.f32.mrb[0].mxu0
        %v1351 = vadd.f32 0.0, %v1350
        %v1352 = vpop.f32.mrb[0].mxu0
        %v1353 = vpop.f32.mrb[0].mxu0
        %v1354 = vpop.f32.mrb[0].mxu0
        %1355 = vdwg.mxu0
        %v1356 = vpack.c.bf16 %v1047, %v1047
        %v1357 = vpack.c.bf16 %v1088, %v1088
        %v1358 = vpack.c.bf16 %v1129, %v1129
        %v1360 = vsel %vm1136, %v1356, 0
        %v1363 = vsel %vm1136, %v1357, 0
        %1365 = vmatprep.subr.bf16.mxu0 0
        %1366 = vmatpush1.bf16.xpose.msra.mxu0 %v1363
        %1367 = vmatprep.subr.bf16.mxu0 0
        %1368 = vmatpush1.bf16.xpose.msra.mxu0 0
        %1369 = vmatprep.subr.bf16.mxu0 0
        %1370 = vmatpush1.bf16.xpose.msra.mxu0 0
        %1371 = vmatprep.subr.bf16.mxu0 0
        %1372 = vmatpush1.bf16.xpose.msra.mxu0 0
        %1373 = vmatprep.subr.bf16.mxu0 0
        %1374 = vmatpush1.bf16.xpose.msra.mxu0 0
        %1375 = vmatprep.subr.bf16.mxu0 0
        %1376 = vmatpush1.bf16.xpose.msra.mxu0 0
        %1377 = vmatprep.subr.bf16.mxu0 0
        %1378 = vmatpush1.bf16.xpose.msra.mxu0 0
        %1379 = vmatprep.subr.bf16.mxu0 0
        %1380 = vmatpush1.bf16.xpose.msra.mxu0 0
        %1381 = vmatprep.subr.bf16.mxu0 0
        %1382 = vmatpush1.bf16.xpose.msra.mxu0 0
        %1383 = vmatprep.subr.bf16.mxu0 0
        %1384 = vmatpush1.bf16.xpose.msra.mxu0 0
        %1385 = vmatprep.subr.bf16.mxu0 0
        %1386 = vmatpush1.bf16.xpose.msra.mxu0 0
        %1387 = vmatprep.subr.bf16.mxu0 0
        %1388 = vmatpush1.bf16.xpose.msra.mxu0 0
        %1389 = vmatprep.subr.bf16.mxu0 0
        %1390 = vmatpush1.bf16.xpose.msra.mxu0 0
        %1391 = vmatprep.subr.bf16.mxu0 0
        %1392 = vmatpush1.bf16.xpose.msra.mxu0 0
        %1393 = vmatprep.subr.bf16.mxu0 0
        %1394 = vmatpush1.bf16.xpose.msra.mxu0 0
        %1395 = vmatprep.subr.bf16.mxu0 0
        %1396 = vmatpush1.bf16.xpose.msra.mxu0 0
        %1397 = vmatprep.mubr.bf16.mxu0 0
        %1398 = vmatmul.mubr.bf16.gmra.mrb[0].mxu0 %v1360
        %v1399 = vpop.f32.mrb[0].mxu0
        %v1400 = vadd.f32 0.0, %v1399
        %v1401 = vpop.f32.mrb[0].mxu0
        %v1402 = vpop.f32.mrb[0].mxu0
        %v1403 = vpop.f32.mrb[0].mxu0
        %1404 = vdwg.mxu0
        %v1405 = vsel %vm1183, %v1400, -inf
        %1406 = vmax.xlane.f32.xlu0 %v1405
        %v1407 = vpop.xlane.xlu0 %1406
        %v1408 = vsub.f32 %v1400, %v1407
        %v1409 = vmul.f32 %v1408, 1.442695
        %v1410 = vpow.pop %v1409
        %v1411 = vsel %vm1183, %v1410, 0.0
        %1412 = vadd.xlane.f32.xlu0 %v1411
        %v1413 = vpop.xlane.xlu0 %1412
        %v1414 = vrcp.pop %v1413
        %v1415 = vmul.f32 %v1410, %v1414
        %v1416 = vpack.c.bf16 %v1415, %v1415
        %v1418 = vsel %vm1183, %v1416, 0
        %v1421 = vsel %vm1199, %v1358, 0
        %1423 = vmatprep.subr.bf16.mxu0 0
        %1424 = vmatpush1.bf16.msra.mxu0 %v1421
        %1425 = vmatprep.subr.bf16.mxu0 0
        %1426 = vmatpush1.bf16.msra.mxu0 0
        %1427 = vmatprep.subr.bf16.mxu0 0
        %1428 = vmatpush1.bf16.msra.mxu0 0
        %1429 = vmatprep.subr.bf16.mxu0 0
        %1430 = vmatpush1.bf16.msra.mxu0 0
        %1431 = vmatprep.subr.bf16.mxu0 0
        %1432 = vmatpush1.bf16.msra.mxu0 0
        %1433 = vmatprep.subr.bf16.mxu0 0
        %1434 = vmatpush1.bf16.msra.mxu0 0
        %1435 = vmatprep.subr.bf16.mxu0 0
        %1436 = vmatpush1.bf16.msra.mxu0 0
        %1437 = vmatprep.subr.bf16.mxu0 0
        %1438 = vmatpush1.bf16.msra.mxu0 0
        %1439 = vmatprep.subr.bf16.mxu0 0
        %1440 = vmatpush1.bf16.msra.mxu0 0
        %1441 = vmatprep.subr.bf16.mxu0 0
        %1442 = vmatpush1.bf16.msra.mxu0 0
        %1443 = vmatprep.subr.bf16.mxu0 0
        %1444 = vmatpush1.bf16.msra.mxu0 0
        %1445 = vmatprep.subr.bf16.mxu0 0
        %1446 = vmatpush1.bf16.msra.mxu0 0
        %1447 = vmatprep.subr.bf16.mxu0 0
        %1448 = vmatpush1.bf16.msra.mxu0 0
        %1449 = vmatprep.subr.bf16.mxu0 0
        %1450 = vmatpush1.bf16.msra.mxu0 0
        %1451 = vmatprep.subr.bf16.mxu0 0
        %1452 = vmatpush1.bf16.msra.mxu0 0
        %1453 = vmatprep.subr.bf16.mxu0 0
        %1454 = vmatpush1.bf16.msra.mxu0 0
        %1455 = vmatprep.mubr.bf16.mxu0 0
        %1456 = vmatmul.mubr.bf16.gmra.mrb[0].mxu0 %v1418
        %v1457 = vpop.f32.mrb[0].mxu0
        %v1458 = vadd.f32 0.0, %v1457
        %v1459 = vpop.f32.mrb[0].mxu0
        %v1460 = vpop.f32.mrb[0].mxu0
        %v1461 = vpop.f32.mrb[0].mxu0
        %1462 = vdwg.mxu0
        %1464 = vrot.lane.b32.xlu0 %v1356, 64
        %v1465 = vpop.permute.xlu0 %1464
        %1467 = vrot.lane.b32.xlu0 %v1357, 64
        %v1468 = vpop.permute.xlu0 %1467
        %v1470 = vsel %vm1136, %v1465, 0
        %v1473 = vsel %vm1136, %v1468, 0
        %1475 = vmatprep.subr.bf16.mxu0 0
        %1476 = vmatpush1.bf16.xpose.msra.mxu0 %v1473
        %1477 = vmatprep.subr.bf16.mxu0 0
        %1478 = vmatpush1.bf16.xpose.msra.mxu0 0
        %1479 = vmatprep.subr.bf16.mxu0 0
        %1480 = vmatpush1.bf16.xpose.msra.mxu0 0
        %1481 = vmatprep.subr.bf16.mxu0 0
        %1482 = vmatpush1.bf16.xpose.msra.mxu0 0
        %1483 = vmatprep.subr.bf16.mxu0 0
        %1484 = vmatpush1.bf16.xpose.msra.mxu0 0
        %1485 = vmatprep.subr.bf16.mxu0 0
        %1486 = vmatpush1.bf16.xpose.msra.mxu0 0
        %1487 = vmatprep.subr.bf16.mxu0 0
        %1488 = vmatpush1.bf16.xpose.msra.mxu0 0
        %1489 = vmatprep.subr.bf16.mxu0 0
        %1490 = vmatpush1.bf16.xpose.msra.mxu0 0
        %1491 = vmatprep.subr.bf16.mxu0 0
        %1492 = vmatpush1.bf16.xpose.msra.mxu0 0
        %1493 = vmatprep.subr.bf16.mxu0 0
        %1494 = vmatpush1.bf16.xpose.msra.mxu0 0
        %1495 = vmatprep.subr.bf16.mxu0 0
        %1496 = vmatpush1.bf16.xpose.msra.mxu0 0
        %1497 = vmatprep.subr.bf16.mxu0 0
        %1498 = vmatpush1.bf16.xpose.msra.mxu0 0
        %1499 = vmatprep.subr.bf16.mxu0 0
        %1500 = vmatpush1.bf16.xpose.msra.mxu0 0
        %1501 = vmatprep.subr.bf16.mxu0 0
        %1502 = vmatpush1.bf16.xpose.msra.mxu0 0
        %1503 = vmatprep.subr.bf16.mxu0 0
        %1504 = vmatpush1.bf16.xpose.msra.mxu0 0
        %1505 = vmatprep.subr.bf16.mxu0 0
        %1506 = vmatpush1.bf16.xpose.msra.mxu0 0
        %1507 = vmatprep.mubr.bf16.mxu0 0
        %1508 = vmatmul.mubr.bf16.gmra.mrb[0].mxu0 %v1470
        %v1509 = vpop.f32.mrb[0].mxu0
        %v1510 = vadd.f32 0.0, %v1509
        %v1511 = vpop.f32.mrb[0].mxu0
        %v1512 = vpop.f32.mrb[0].mxu0
        %v1513 = vpop.f32.mrb[0].mxu0
        %1514 = vdwg.mxu0
        %v1515 = vsel %vm1183, %v1510, -inf
        %1516 = vmax.xlane.f32.xlu0 %v1515
        %v1517 = vpop.xlane.xlu0 %1516
        %v1518 = vsub.f32 %v1510, %v1517
        %v1519 = vmul.f32 %v1518, 1.442695
        %v1520 = vpow.pop %v1519
        %v1521 = vsel %vm1183, %v1520, 0.0
        %1522 = vadd.xlane.f32.xlu0 %v1521
        %v1523 = vpop.xlane.xlu0 %1522
        %v1524 = vrcp.pop %v1523
        %v1525 = vmul.f32 %v1520, %v1524
        %v1526 = vpack.c.bf16 %v1525, %v1525
        %1528 = vrot.lane.b32.xlu0 %v1358, 64
        %v1529 = vpop.permute.xlu0 %1528
        %v1531 = vsel %vm1183, %v1526, 0
        %v1534 = vsel %vm1199, %v1529, 0
        %1536 = vmatprep.subr.bf16.mxu0 0
        %1537 = vmatpush1.bf16.msra.mxu0 %v1534
        %1538 = vmatprep.subr.bf16.mxu0 0
        %1539 = vmatpush1.bf16.msra.mxu0 0
        %1540 = vmatprep.subr.bf16.mxu0 0
        %1541 = vmatpush1.bf16.msra.mxu0 0
        %1542 = vmatprep.subr.bf16.mxu0 0
        %1543 = vmatpush1.bf16.msra.mxu0 0
        %1544 = vmatprep.subr.bf16.mxu0 0
        %1545 = vmatpush1.bf16.msra.mxu0 0
        %1546 = vmatprep.subr.bf16.mxu0 0
        %1547 = vmatpush1.bf16.msra.mxu0 0
        %1548 = vmatprep.subr.bf16.mxu0 0
        %1549 = vmatpush1.bf16.msra.mxu0 0
        %1550 = vmatprep.subr.bf16.mxu0 0
        %1551 = vmatpush1.bf16.msra.mxu0 0
        %1552 = vmatprep.subr.bf16.mxu0 0
        %1553 = vmatpush1.bf16.msra.mxu0 0
        %1554 = vmatprep.subr.bf16.mxu0 0
        %1555 = vmatpush1.bf16.msra.mxu0 0
        %1556 = vmatprep.subr.bf16.mxu0 0
        %1557 = vmatpush1.bf16.msra.mxu0 0
        %1558 = vmatprep.subr.bf16.mxu0 0
        %1559 = vmatpush1.bf16.msra.mxu0 0
        %1560 = vmatprep.subr.bf16.mxu0 0
        %1561 = vmatpush1.bf16.msra.mxu0 0
        %1562 = vmatprep.subr.bf16.mxu0 0
        %1563 = vmatpush1.bf16.msra.mxu0 0
        %1564 = vmatprep.subr.bf16.mxu0 0
        %1565 = vmatpush1.bf16.msra.mxu0 0
        %1566 = vmatprep.subr.bf16.mxu0 0
        %1567 = vmatpush1.bf16.msra.mxu0 0
        %1568 = vmatprep.mubr.bf16.mxu0 0
        %1569 = vmatmul.mubr.bf16.gmra.mrb[0].mxu0 %v1531
        %v1570 = vpop.f32.mrb[0].mxu0
        %v1571 = vadd.f32 0.0, %v1570
        %v1572 = vpop.f32.mrb[0].mxu0
        %v1573 = vpop.f32.mrb[0].mxu0
        %v1574 = vpop.f32.mrb[0].mxu0
        %1575 = vdwg.mxu0
        %1577 = vrot.lane.b32.xlu0 %v1351, 64
        %v1578 = vpop.permute.xlu0 %1577
        %1581 = vrot.lane.b32.xlu0 %v1571, 64
        %v1582 = vpop.permute.xlu0 %1581
        %v1584 = vsel %vm1136, %v1238, %v1578
        %v1585 = vsel %vm1136, %v1458, %v1582
        %v1586 = vpack.c.bf16 %v1584, %v1584
        %v1587 = vpack.c.bf16 %v1585, %v1585
        %v1588 = vld [vmem:[%s560] sm:$0xf]
        %v1589 = vld [vmem:[%s560 + $0x4] sm:$0xf]
        %v1590 = vld [vmem:[%s560 + $0x8] sm:$0xf]
        %v1591 = vld [vmem:[%s560 + $0xc] sm:$0xf]
        %v1592 = vld [vmem:[%s560 + $0x10] sm:$0xf]
        %v1593 = vld [vmem:[%s560 + $0x14] sm:$0xf]
        %v1594 = vld [vmem:[%s560 + $0x18] sm:$0xf]
        %v1595 = vld [vmem:[%s560 + $0x1c] sm:$0xf]
        %v1596 = vld [vmem:[%s560 + $0x20] sm:$0xf]
        %v1597 = vld [vmem:[%s560 + $0x24] sm:$0xf]
        %v1598 = vld [vmem:[%s560 + $0x28] sm:$0xf]
        %v1599 = vld [vmem:[%s560 + $0x2c] sm:$0xf]
        %v1600 = vld [vmem:[%s560 + $0x30] sm:$0xf]
        %v1601 = vld [vmem:[%s560 + $0x34] sm:$0xf]
        %v1602 = vld [vmem:[%s560 + $0x38] sm:$0xf]
        %v1603 = vld [vmem:[%s560 + $0x3c] sm:$0xf]
        %v1604 = vld [vmem:[%s560 + $0x40] sm:$0xf]
        %v1605 = vld [vmem:[%s560 + $0x44] sm:$0xf]
        %v1606 = vld [vmem:[%s560 + $0x48] sm:$0xf]
        %v1607 = vld [vmem:[%s560 + $0x4c] sm:$0xf]
        %v1608 = vld [vmem:[%s560 + $0x50] sm:$0xf]
        %v1609 = vld [vmem:[%s560 + $0x54] sm:$0xf]
        %v1610 = vld [vmem:[%s560 + $0x58] sm:$0xf]
        %v1611 = vld [vmem:[%s560 + $0x5c] sm:$0xf]
        %v1612 = vld [vmem:[%s560 + $0x60] sm:$0xf]
        %v1613 = vld [vmem:[%s560 + $0x64] sm:$0xf]
        %v1614 = vld [vmem:[%s560 + $0x68] sm:$0xf]
        %v1615 = vld [vmem:[%s560 + $0x6c] sm:$0xf]
        %v1616 = vld [vmem:[%s560 + $0x70] sm:$0xf]
        %v1617 = vld [vmem:[%s560 + $0x74] sm:$0xf]
        %v1618 = vld [vmem:[%s560 + $0x78] sm:$0xf]
        %v1619 = vld [vmem:[%s560 + $0x7c] sm:$0xf]
        %v1620 = vld [vmem:[%s677] sm:$0x1]
        %v1622 = vlaneseq
        %v1623 = vshrl.u32 %v1622, 7
        %v1624 = vsub.s32 0, %v1623
        %v1625 = vrot.slane %v1620, %v1624
        %v1659 = vunpack.c.l.b16 %v1588
        %v1660 = vunpack.c.l.b16 %v1589
        %v1661 = vunpack.c.l.b16 %v1590
        %v1662 = vunpack.c.l.b16 %v1591
        %v1663 = vunpack.c.l.b16 %v1592
        %v1664 = vunpack.c.l.b16 %v1593
        %v1665 = vunpack.c.l.b16 %v1594
        %v1666 = vunpack.c.l.b16 %v1595
        %v1667 = vunpack.c.l.b16 %v1596
        %v1668 = vunpack.c.l.b16 %v1597
        %v1669 = vunpack.c.l.b16 %v1598
        %v1670 = vunpack.c.l.b16 %v1599
        %v1671 = vunpack.c.l.b16 %v1600
        %v1672 = vunpack.c.l.b16 %v1601
        %v1673 = vunpack.c.l.b16 %v1602
        %v1674 = vunpack.c.l.b16 %v1603
        %v1675 = vunpack.c.l.b16 %v1604
        %v1676 = vunpack.c.l.b16 %v1605
        %v1677 = vunpack.c.l.b16 %v1606
        %v1678 = vunpack.c.l.b16 %v1607
        %v1679 = vunpack.c.l.b16 %v1608
        %v1680 = vunpack.c.l.b16 %v1609
        %v1681 = vunpack.c.l.b16 %v1610
        %v1682 = vunpack.c.l.b16 %v1611
        %v1683 = vunpack.c.l.b16 %v1612
        %v1684 = vunpack.c.l.b16 %v1613
        %v1685 = vunpack.c.l.b16 %v1614
        %v1686 = vunpack.c.l.b16 %v1615
        %v1687 = vunpack.c.l.b16 %v1616
        %v1688 = vunpack.c.l.b16 %v1617
        %v1689 = vunpack.c.l.b16 %v1618
        %v1690 = vunpack.c.l.b16 %v1619
        %v1691 = vpack.c.b16 %v1660, %v1659
        %v1692 = vpack.c.b16 %v1662, %v1661
        %v1693 = vpack.c.b16 %v1664, %v1663
        %v1694 = vpack.c.b16 %v1666, %v1665
        %v1695 = vpack.c.b16 %v1668, %v1667
        %v1696 = vpack.c.b16 %v1670, %v1669
        %v1697 = vpack.c.b16 %v1672, %v1671
        %v1698 = vpack.c.b16 %v1674, %v1673
        %v1699 = vpack.c.b16 %v1676, %v1675
        %v1700 = vpack.c.b16 %v1678, %v1677
        %v1701 = vpack.c.b16 %v1680, %v1679
        %v1702 = vpack.c.b16 %v1682, %v1681
        %v1703 = vpack.c.b16 %v1684, %v1683
        %v1704 = vpack.c.b16 %v1686, %v1685
        %v1705 = vpack.c.b16 %v1688, %v1687
        %v1706 = vpack.c.b16 %v1690, %v1689
        %1723 = vmatprep.subr.bf16.mxu0 0
        %1724 = vmatpush1.bf16.msra.mxu0 %v1691
        %1725 = vmatprep.subr.bf16.mxu0 0
        %1726 = vmatpush1.bf16.msra.mxu0 %v1692
        %1727 = vmatprep.subr.bf16.mxu0 0
        %1728 = vmatpush1.bf16.msra.mxu0 %v1693
        %1729 = vmatprep.subr.bf16.mxu0 0
        %1730 = vmatpush1.bf16.msra.mxu0 %v1694
        %1731 = vmatprep.subr.bf16.mxu0 0
        %1732 = vmatpush1.bf16.msra.mxu0 %v1695
        %1733 = vmatprep.subr.bf16.mxu0 0
        %1734 = vmatpush1.bf16.msra.mxu0 %v1696
        %1735 = vmatprep.subr.bf16.mxu0 0
        %1736 = vmatpush1.bf16.msra.mxu0 %v1697
        %1737 = vmatprep.subr.bf16.mxu0 0
        %1738 = vmatpush1.bf16.msra.mxu0 %v1698
        %1739 = vmatprep.subr.bf16.mxu0 0
        %1740 = vmatpush1.bf16.msra.mxu0 %v1699
        %1741 = vmatprep.subr.bf16.mxu0 0
        %1742 = vmatpush1.bf16.msra.mxu0 %v1700
        %1743 = vmatprep.subr.bf16.mxu0 0
        %1744 = vmatpush1.bf16.msra.mxu0 %v1701
        %1745 = vmatprep.subr.bf16.mxu0 0
        %1746 = vmatpush1.bf16.msra.mxu0 %v1702
        %1747 = vmatprep.subr.bf16.mxu0 0
        %1748 = vmatpush1.bf16.msra.mxu0 %v1703
        %1749 = vmatprep.subr.bf16.mxu0 0
        %1750 = vmatpush1.bf16.msra.mxu0 %v1704
        %1751 = vmatprep.subr.bf16.mxu0 0
        %1752 = vmatpush1.bf16.msra.mxu0 %v1705
        %1753 = vmatprep.subr.bf16.mxu0 0
        %1754 = vmatpush1.bf16.msra.mxu0 %v1706
        %1755 = vmatprep.mubr.bf16.mxu0 %v1587
        %1756 = vmatmul.mubr.bf16.gmra.mrb[0].mxu0 %v1586
        %v1757 = vpop.f32.mrb[0].mxu0
        %v1758 = vadd.f32 %v1625, %v1757
        %v1759 = vpop.f32.mrb[0].mxu0
        %v1760 = vpop.f32.mrb[0].mxu0
        %v1761 = vpop.f32.mrb[0].mxu0
        %1762 = vdwg.mxu0
        %v1763 = vadd.f32 %v1758, %v720
        %v1764 = vld [vmem:[%s568] sm:$0x1]
        %v1765 = vld [vmem:[%s576] sm:$0x1]
        %1766 = vadd.xlane.f32.xlu0 %v1763
        %v1767 = vpop.xlane.xlu0 %1766
        %v1768 = vmul.f32 %v1767, %v697
        %v1769 = vsub.f32 %v1763, %v1768
        %v1770 = vmul.f32 %v1769, %v1769
        %1771 = vadd.xlane.f32.xlu0 %v1770
        %v1772 = vpop.xlane.xlu0 %1771
        %v1773 = vmul.f32 %v1772, %v697
        %v1774 = vadd.f32 %v1773, 1e-05
        %v1775 = vrsqrt.pop %v1774
        %v1776 = vmul.f32 %v1769, %v1775
        %v1778 = vlaneseq
        %v1779 = vshrl.u32 %v1778, 7
        %v1780 = vsub.s32 0, %v1779
        %v1781 = vrot.slane %v1764, %v1780
        %v1783 = vmul.f32 %v1776, %v1781
        %v1785 = vlaneseq
        %v1786 = vshrl.u32 %v1785, 7
        %v1787 = vsub.s32 0, %v1786
        %v1788 = vrot.slane %v1765, %v1787
        %v1790 = vadd.f32 %v1783, %v1788
        %v1791 = vpack.c.bf16 %v1790, %v1790
        %v1792 = vld [vmem:[%s585] sm:$0xff]
        %v1793 = vld [vmem:[%s585 + $0x8] sm:$0xff]
        %v1794 = vld [vmem:[%s585 + $0x10] sm:$0xff]
        %v1795 = vld [vmem:[%s585 + $0x18] sm:$0xff]
        %v1796 = vld [vmem:[%s585 + $0x20] sm:$0xff]
        %v1797 = vld [vmem:[%s585 + $0x28] sm:$0xff]
        %v1798 = vld [vmem:[%s585 + $0x30] sm:$0xff]
        %v1799 = vld [vmem:[%s585 + $0x38] sm:$0xff]
        %v1800 = vld [vmem:[%s585 + $0x40] sm:$0xff]
        %v1801 = vld [vmem:[%s585 + $0x48] sm:$0xff]
        %v1802 = vld [vmem:[%s585 + $0x50] sm:$0xff]
        %v1803 = vld [vmem:[%s585 + $0x58] sm:$0xff]
        %v1804 = vld [vmem:[%s585 + $0x60] sm:$0xff]
        %v1805 = vld [vmem:[%s585 + $0x68] sm:$0xff]
        %v1806 = vld [vmem:[%s585 + $0x70] sm:$0xff]
        %v1807 = vld [vmem:[%s585 + $0x78] sm:$0xff]
        %v1808 = vld [vmem:[%s585 + $0x80] sm:$0xff]
        %v1809 = vld [vmem:[%s585 + $0x88] sm:$0xff]
        %v1810 = vld [vmem:[%s585 + $0x90] sm:$0xff]
        %v1811 = vld [vmem:[%s585 + $0x98] sm:$0xff]
        %v1812 = vld [vmem:[%s585 + $0xa0] sm:$0xff]
        %v1813 = vld [vmem:[%s585 + $0xa8] sm:$0xff]
        %v1814 = vld [vmem:[%s585 + $0xb0] sm:$0xff]
        %v1815 = vld [vmem:[%s585 + $0xb8] sm:$0xff]
        %v1816 = vld [vmem:[%s585 + $0xc0] sm:$0xff]
        %v1817 = vld [vmem:[%s585 + $0xc8] sm:$0xff]
        %v1818 = vld [vmem:[%s585 + $0xd0] sm:$0xff]
        %v1819 = vld [vmem:[%s585 + $0xd8] sm:$0xff]
        %v1820 = vld [vmem:[%s585 + $0xe0] sm:$0xff]
        %v1821 = vld [vmem:[%s585 + $0xe8] sm:$0xff]
        %v1822 = vld [vmem:[%s585 + $0xf0] sm:$0xff]
        %v1823 = vld [vmem:[%s585 + $0xf8] sm:$0xff]
        %v1824 = vld [vmem:[%s585 + $0x100] sm:$0xff]
        %v1825 = vld [vmem:[%s585 + $0x108] sm:$0xff]
        %v1826 = vld [vmem:[%s585 + $0x110] sm:$0xff]
        %v1827 = vld [vmem:[%s585 + $0x118] sm:$0xff]
        %v1828 = vld [vmem:[%s585 + $0x120] sm:$0xff]
        %v1829 = vld [vmem:[%s585 + $0x128] sm:$0xff]
        %v1830 = vld [vmem:[%s585 + $0x130] sm:$0xff]
        %v1831 = vld [vmem:[%s585 + $0x138] sm:$0xff]
        %v1832 = vld [vmem:[%s585 + $0x140] sm:$0xff]
        %v1833 = vld [vmem:[%s585 + $0x148] sm:$0xff]
        %v1834 = vld [vmem:[%s585 + $0x150] sm:$0xff]
        %v1835 = vld [vmem:[%s585 + $0x158] sm:$0xff]
        %v1836 = vld [vmem:[%s585 + $0x160] sm:$0xff]
        %v1837 = vld [vmem:[%s585 + $0x168] sm:$0xff]
        %v1838 = vld [vmem:[%s585 + $0x170] sm:$0xff]
        %v1839 = vld [vmem:[%s585 + $0x178] sm:$0xff]
        %v1840 = vld [vmem:[%s585 + $0x180] sm:$0xff]
        %v1841 = vld [vmem:[%s585 + $0x188] sm:$0xff]
        %v1842 = vld [vmem:[%s585 + $0x190] sm:$0xff]
        %v1843 = vld [vmem:[%s585 + $0x198] sm:$0xff]
        %v1844 = vld [vmem:[%s585 + $0x1a0] sm:$0xff]
        %v1845 = vld [vmem:[%s585 + $0x1a8] sm:$0xff]
        %v1846 = vld [vmem:[%s585 + $0x1b0] sm:$0xff]
        %v1847 = vld [vmem:[%s585 + $0x1b8] sm:$0xff]
        %v1848 = vld [vmem:[%s585 + $0x1c0] sm:$0xff]
        %v1849 = vld [vmem:[%s585 + $0x1c8] sm:$0xff]
        %v1850 = vld [vmem:[%s585 + $0x1d0] sm:$0xff]
        %v1851 = vld [vmem:[%s585 + $0x1d8] sm:$0xff]
        %v1852 = vld [vmem:[%s585 + $0x1e0] sm:$0xff]
        %v1853 = vld [vmem:[%s585 + $0x1e8] sm:$0xff]
        %v1854 = vld [vmem:[%s585 + $0x1f0] sm:$0xff]
        %v1855 = vld [vmem:[%s585 + $0x1f8] sm:$0xff]
        %v1856 = vld [vmem:[%s681] sm:$0xff]
        %v1858 = vlaneseq
        %v1859 = vshrl.u32 %v1858, 7
        %v1860 = vsub.s32 0, %v1859
        %v1861 = vrot.slane %v1856, %v1860
        %v1862 = vlaneseq
        %v1863 = vshrl.u32 %v1862, 7
        %v1864 = vsub.s32 1, %v1863
        %v1865 = vrot.slane %v1856, %v1864
        %v1866 = vlaneseq
        %v1867 = vshrl.u32 %v1866, 7
        %v1868 = vsub.s32 2, %v1867
        %v1869 = vrot.slane %v1856, %v1868
        %v1870 = vlaneseq
        %v1871 = vshrl.u32 %v1870, 7
        %v1872 = vsub.s32 3, %v1871
        %v1873 = vrot.slane %v1856, %v1872
        %v1874 = vlaneseq
        %v1875 = vshrl.u32 %v1874, 7
        %v1876 = vsub.s32 4, %v1875
        %v1877 = vrot.slane %v1856, %v1876
        %v1878 = vlaneseq
        %v1879 = vshrl.u32 %v1878, 7
        %v1880 = vsub.s32 5, %v1879
        %v1881 = vrot.slane %v1856, %v1880
        %v1882 = vlaneseq
        %v1883 = vshrl.u32 %v1882, 7
        %v1884 = vsub.s32 6, %v1883
        %v1885 = vrot.slane %v1856, %v1884
        %v1886 = vlaneseq
        %v1887 = vshrl.u32 %v1886, 7
        %v1888 = vsub.s32 7, %v1887
        %v1889 = vrot.slane %v1856, %v1888
        %v1962 = vunpack.c.l.b16 %v1792
        %v1963 = vunpack.c.h.b16 %v1792
        %v1964 = vunpack.c.l.b16 %v1793
        %v1965 = vunpack.c.h.b16 %v1793
        %v1966 = vunpack.c.l.b16 %v1794
        %v1967 = vunpack.c.h.b16 %v1794
        %v1968 = vunpack.c.l.b16 %v1795
        %v1969 = vunpack.c.h.b16 %v1795
        %v1970 = vunpack.c.l.b16 %v1796
        %v1971 = vunpack.c.h.b16 %v1796
        %v1972 = vunpack.c.l.b16 %v1797
        %v1973 = vunpack.c.h.b16 %v1797
        %v1974 = vunpack.c.l.b16 %v1798
        %v1975 = vunpack.c.h.b16 %v1798
        %v1976 = vunpack.c.l.b16 %v1799
        %v1977 = vunpack.c.h.b16 %v1799
        %v1978 = vunpack.c.l.b16 %v1800
        %v1979 = vunpack.c.h.b16 %v1800
        %v1980 = vunpack.c.l.b16 %v1801
        %v1981 = vunpack.c.h.b16 %v1801
        %v1982 = vunpack.c.l.b16 %v1802
        %v1983 = vunpack.c.h.b16 %v1802
        %v1984 = vunpack.c.l.b16 %v1803
        %v1985 = vunpack.c.h.b16 %v1803
        %v1986 = vunpack.c.l.b16 %v1804
        %v1987 = vunpack.c.h.b16 %v1804
        %v1988 = vunpack.c.l.b16 %v1805
        %v1989 = vunpack.c.h.b16 %v1805
        %v1990 = vunpack.c.l.b16 %v1806
        %v1991 = vunpack.c.h.b16 %v1806
        %v1992 = vunpack.c.l.b16 %v1807
        %v1993 = vunpack.c.h.b16 %v1807
        %v1994 = vunpack.c.l.b16 %v1808
        %v1995 = vunpack.c.h.b16 %v1808
        %v1996 = vunpack.c.l.b16 %v1809
        %v1997 = vunpack.c.h.b16 %v1809
        %v1998 = vunpack.c.l.b16 %v1810
        %v1999 = vunpack.c.h.b16 %v1810
        %v2000 = vunpack.c.l.b16 %v1811
        %v2001 = vunpack.c.h.b16 %v1811
        %v2002 = vunpack.c.l.b16 %v1812
        %v2003 = vunpack.c.h.b16 %v1812
        %v2004 = vunpack.c.l.b16 %v1813
        %v2005 = vunpack.c.h.b16 %v1813
        %v2006 = vunpack.c.l.b16 %v1814
        %v2007 = vunpack.c.h.b16 %v1814
        %v2008 = vunpack.c.l.b16 %v1815
        %v2009 = vunpack.c.h.b16 %v1815
        %v2010 = vunpack.c.l.b16 %v1816
        %v2011 = vunpack.c.h.b16 %v1816
        %v2012 = vunpack.c.l.b16 %v1817
        %v2013 = vunpack.c.h.b16 %v1817
        %v2014 = vunpack.c.l.b16 %v1818
        %v2015 = vunpack.c.h.b16 %v1818
        %v2016 = vunpack.c.l.b16 %v1819
        %v2017 = vunpack.c.h.b16 %v1819
        %v2018 = vunpack.c.l.b16 %v1820
        %v2019 = vunpack.c.h.b16 %v1820
        %v2020 = vunpack.c.l.b16 %v1821
        %v2021 = vunpack.c.h.b16 %v1821
        %v2022 = vunpack.c.l.b16 %v1822
        %v2023 = vunpack.c.h.b16 %v1822
        %v2024 = vunpack.c.l.b16 %v1823
        %v2025 = vunpack.c.h.b16 %v1823
        %v2026 = vunpack.c.l.b16 %v1824
        %v2027 = vunpack.c.h.b16 %v1824
        %v2028 = vunpack.c.l.b16 %v1825
        %v2029 = vunpack.c.h.b16 %v1825
        %v2030 = vunpack.c.l.b16 %v1826
        %v2031 = vunpack.c.h.b16 %v1826
        %v2032 = vunpack.c.l.b16 %v1827
        %v2033 = vunpack.c.h.b16 %v1827
        %v2034 = vunpack.c.l.b16 %v1828
        %v2035 = vunpack.c.h.b16 %v1828
        %v2036 = vunpack.c.l.b16 %v1829
        %v2037 = vunpack.c.h.b16 %v1829
        %v2038 = vunpack.c.l.b16 %v1830
        %v2039 = vunpack.c.h.b16 %v1830
        %v2040 = vunpack.c.l.b16 %v1831
        %v2041 = vunpack.c.h.b16 %v1831
        %v2042 = vunpack.c.l.b16 %v1832
        %v2043 = vunpack.c.h.b16 %v1832
        %v2044 = vunpack.c.l.b16 %v1833
        %v2045 = vunpack.c.h.b16 %v1833
        %v2046 = vunpack.c.l.b16 %v1834
        %v2047 = vunpack.c.h.b16 %v1834
        %v2048 = vunpack.c.l.b16 %v1835
        %v2049 = vunpack.c.h.b16 %v1835
        %v2050 = vunpack.c.l.b16 %v1836
        %v2051 = vunpack.c.h.b16 %v1836
        %v2052 = vunpack.c.l.b16 %v1837
        %v2053 = vunpack.c.h.b16 %v1837
        %v2054 = vunpack.c.l.b16 %v1838
        %v2055 = vunpack.c.h.b16 %v1838
        %v2056 = vunpack.c.l.b16 %v1839
        %v2057 = vunpack.c.h.b16 %v1839
        %v2058 = vunpack.c.l.b16 %v1840
        %v2059 = vunpack.c.h.b16 %v1840
        %v2060 = vunpack.c.l.b16 %v1841
        %v2061 = vunpack.c.h.b16 %v1841
        %v2062 = vunpack.c.l.b16 %v1842
        %v2063 = vunpack.c.h.b16 %v1842
        %v2064 = vunpack.c.l.b16 %v1843
        %v2065 = vunpack.c.h.b16 %v1843
        %v2066 = vunpack.c.l.b16 %v1844
        %v2067 = vunpack.c.h.b16 %v1844
        %v2068 = vunpack.c.l.b16 %v1845
        %v2069 = vunpack.c.h.b16 %v1845
        %v2070 = vunpack.c.l.b16 %v1846
        %v2071 = vunpack.c.h.b16 %v1846
        %v2072 = vunpack.c.l.b16 %v1847
        %v2073 = vunpack.c.h.b16 %v1847
        %v2074 = vunpack.c.l.b16 %v1848
        %v2075 = vunpack.c.h.b16 %v1848
        %v2076 = vunpack.c.l.b16 %v1849
        %v2077 = vunpack.c.h.b16 %v1849
        %v2078 = vunpack.c.l.b16 %v1850
        %v2079 = vunpack.c.h.b16 %v1850
        %v2080 = vunpack.c.l.b16 %v1851
        %v2081 = vunpack.c.h.b16 %v1851
        %v2082 = vunpack.c.l.b16 %v1852
        %v2083 = vunpack.c.h.b16 %v1852
        %v2084 = vunpack.c.l.b16 %v1853
        %v2085 = vunpack.c.h.b16 %v1853
        %v2086 = vunpack.c.l.b16 %v1854
        %v2087 = vunpack.c.h.b16 %v1854
        %v2088 = vunpack.c.l.b16 %v1855
        %v2089 = vunpack.c.h.b16 %v1855
        %v2090 = vpack.c.b16 %v1970, %v1962
        %v2091 = vpack.c.b16 %v1971, %v1963
        %v2092 = vpack.c.b16 %v1972, %v1964
        %v2093 = vpack.c.b16 %v1973, %v1965
        %v2094 = vpack.c.b16 %v1974, %v1966
        %v2095 = vpack.c.b16 %v1975, %v1967
        %v2096 = vpack.c.b16 %v1976, %v1968
        %v2097 = vpack.c.b16 %v1977, %v1969
        %v2098 = vpack.c.b16 %v1986, %v1978
        %v2099 = vpack.c.b16 %v1987, %v1979
        %v2100 = vpack.c.b16 %v1988, %v1980
        %v2101 = vpack.c.b16 %v1989, %v1981
        %v2102 = vpack.c.b16 %v1990, %v1982
        %v2103 = vpack.c.b16 %v1991, %v1983
        %v2104 = vpack.c.b16 %v1992, %v1984
        %v2105 = vpack.c.b16 %v1993, %v1985
        %v2106 = vpack.c.b16 %v2002, %v1994
        %v2107 = vpack.c.b16 %v2003, %v1995
        %v2108 = vpack.c.b16 %v2004, %v1996
        %v2109 = vpack.c.b16 %v2005, %v1997
        %v2110 = vpack.c.b16 %v2006, %v1998
        %v2111 = vpack.c.b16 %v2007, %v1999
        %v2112 = vpack.c.b16 %v2008, %v2000
        %v2113 = vpack.c.b16 %v2009, %v2001
        %v2114 = vpack.c.b16 %v2018, %v2010
        %v2115 = vpack.c.b16 %v2019, %v2011
        %v2116 = vpack.c.b16 %v2020, %v2012
        %v2117 = vpack.c.b16 %v2021, %v2013
        %v2118 = vpack.c.b16 %v2022, %v2014
        %v2119 = vpack.c.b16 %v2023, %v2015
        %v2120 = vpack.c.b16 %v2024, %v2016
        %v2121 = vpack.c.b16 %v2025, %v2017
        %v2122 = vpack.c.b16 %v2034, %v2026
        %v2123 = vpack.c.b16 %v2035, %v2027
        %v2124 = vpack.c.b16 %v2036, %v2028
        %v2125 = vpack.c.b16 %v2037, %v2029
        %v2126 = vpack.c.b16 %v2038, %v2030
        %v2127 = vpack.c.b16 %v2039, %v2031
        %v2128 = vpack.c.b16 %v2040, %v2032
        %v2129 = vpack.c.b16 %v2041, %v2033
        %v2130 = vpack.c.b16 %v2050, %v2042
        %v2131 = vpack.c.b16 %v2051, %v2043
        %v2132 = vpack.c.b16 %v2052, %v2044
        %v2133 = vpack.c.b16 %v2053, %v2045
        %v2134 = vpack.c.b16 %v2054, %v2046
        %v2135 = vpack.c.b16 %v2055, %v2047
        %v2136 = vpack.c.b16 %v2056, %v2048
        %v2137 = vpack.c.b16 %v2057, %v2049
        %v2138 = vpack.c.b16 %v2066, %v2058
        %v2139 = vpack.c.b16 %v2067, %v2059
        %v2140 = vpack.c.b16 %v2068, %v2060
        %v2141 = vpack.c.b16 %v2069, %v2061
        %v2142 = vpack.c.b16 %v2070, %v2062
        %v2143 = vpack.c.b16 %v2071, %v2063
        %v2144 = vpack.c.b16 %v2072, %v2064
        %v2145 = vpack.c.b16 %v2073, %v2065
        %v2146 = vpack.c.b16 %v2082, %v2074
        %v2147 = vpack.c.b16 %v2083, %v2075
        %v2148 = vpack.c.b16 %v2084, %v2076
        %v2149 = vpack.c.b16 %v2085, %v2077
        %v2150 = vpack.c.b16 %v2086, %v2078
        %v2151 = vpack.c.b16 %v2087, %v2079
        %v2152 = vpack.c.b16 %v2088, %v2080
        %v2153 = vpack.c.b16 %v2089, %v2081
        %2218 = vmatprep.subr.bf16.mxu0 %v2091
        %2219 = vmatpush1.bf16.msra.mxu0 %v2090
        %2220 = vmatprep.subr.bf16.mxu0 %v2099
        %2221 = vmatpush1.bf16.msra.mxu0 %v2098
        %2222 = vmatprep.subr.bf16.mxu0 %v2107
        %2223 = vmatpush1.bf16.msra.mxu0 %v2106
        %2224 = vmatprep.subr.bf16.mxu0 %v2115
        %2225 = vmatpush1.bf16.msra.mxu0 %v2114
        %2226 = vmatprep.subr.bf16.mxu0 %v2123
        %2227 = vmatpush1.bf16.msra.mxu0 %v2122
        %2228 = vmatprep.subr.bf16.mxu0 %v2131
        %2229 = vmatpush1.bf16.msra.mxu0 %v2130
        %2230 = vmatprep.subr.bf16.mxu0 %v2139
        %2231 = vmatpush1.bf16.msra.mxu0 %v2138
        %2232 = vmatprep.subr.bf16.mxu0 %v2147
        %2233 = vmatpush1.bf16.msra.mxu0 %v2146
        %2234 = vmatprep.subr.bf16.mxu0 0
        %2235 = vmatpush1.bf16.msra.mxu0 0
        %2236 = vmatprep.subr.bf16.mxu0 0
        %2237 = vmatpush1.bf16.msra.mxu0 0
        %2238 = vmatprep.subr.bf16.mxu0 0
        %2239 = vmatpush1.bf16.msra.mxu0 0
        %2240 = vmatprep.subr.bf16.mxu0 0
        %2241 = vmatpush1.bf16.msra.mxu0 0
        %2242 = vmatprep.subr.bf16.mxu0 0
        %2243 = vmatpush1.bf16.msra.mxu0 0
        %2244 = vmatprep.subr.bf16.mxu0 0
        %2245 = vmatpush1.bf16.msra.mxu0 0
        %2246 = vmatprep.subr.bf16.mxu0 0
        %2247 = vmatpush1.bf16.msra.mxu0 0
        %2248 = vmatprep.subr.bf16.mxu0 0
        %2249 = vmatpush1.bf16.msra.mxu0 0
        %2250 = vmatprep.mubr.bf16.mxu0 0
        %2251 = vmatmul.mubr.bf16.gmra.mrb[0].mxu0 %v1791
        %v2252 = vpop.f32.mrb[0].mxu0
        %v2253 = vadd.f32 %v1861, %v2252
        %v2254 = vpop.f32.mrb[0].mxu0
        %v2255 = vadd.f32 %v1865, %v2254
        %v2256 = vpop.f32.mrb[0].mxu0
        %v2257 = vpop.f32.mrb[0].mxu0
        %2258 = vdwg.mxu0
        %2259 = vmatprep.subr.bf16.mxu0 %v2093
        %2260 = vmatpush1.bf16.msra.mxu0 %v2092
        %2261 = vmatprep.subr.bf16.mxu0 %v2101
        %2262 = vmatpush1.bf16.msra.mxu0 %v2100
        %2263 = vmatprep.subr.bf16.mxu0 %v2109
        %2264 = vmatpush1.bf16.msra.mxu0 %v2108
        %2265 = vmatprep.subr.bf16.mxu0 %v2117
        %2266 = vmatpush1.bf16.msra.mxu0 %v2116
        %2267 = vmatprep.subr.bf16.mxu0 %v2125
        %2268 = vmatpush1.bf16.msra.mxu0 %v2124
        %2269 = vmatprep.subr.bf16.mxu0 %v2133
        %2270 = vmatpush1.bf16.msra.mxu0 %v2132
        %2271 = vmatprep.subr.bf16.mxu0 %v2141
        %2272 = vmatpush1.bf16.msra.mxu0 %v2140
        %2273 = vmatprep.subr.bf16.mxu0 %v2149
        %2274 = vmatpush1.bf16.msra.mxu0 %v2148
        %2275 = vmatprep.subr.bf16.mxu0 0
        %2276 = vmatpush1.bf16.msra.mxu0 0
        %2277 = vmatprep.subr.bf16.mxu0 0
        %2278 = vmatpush1.bf16.msra.mxu0 0
        %2279 = vmatprep.subr.bf16.mxu0 0
        %2280 = vmatpush1.bf16.msra.mxu0 0
        %2281 = vmatprep.subr.bf16.mxu0 0
        %2282 = vmatpush1.bf16.msra.mxu0 0
        %2283 = vmatprep.subr.bf16.mxu0 0
        %2284 = vmatpush1.bf16.msra.mxu0 0
        %2285 = vmatprep.subr.bf16.mxu0 0
        %2286 = vmatpush1.bf16.msra.mxu0 0
        %2287 = vmatprep.subr.bf16.mxu0 0
        %2288 = vmatpush1.bf16.msra.mxu0 0
        %2289 = vmatprep.subr.bf16.mxu0 0
        %2290 = vmatpush1.bf16.msra.mxu0 0
        %2291 = vmatprep.mubr.bf16.mxu0 0
        %2292 = vmatmul.mubr.bf16.gmra.mrb[0].mxu0 %v1791
        %v2293 = vpop.f32.mrb[0].mxu0
        %v2294 = vadd.f32 %v1869, %v2293
        %v2295 = vpop.f32.mrb[0].mxu0
        %v2296 = vadd.f32 %v1873, %v2295
        %v2297 = vpop.f32.mrb[0].mxu0
        %v2298 = vpop.f32.mrb[0].mxu0
        %2299 = vdwg.mxu0
        %2300 = vmatprep.subr.bf16.mxu0 %v2095
        %2301 = vmatpush1.bf16.msra.mxu0 %v2094
        %2302 = vmatprep.subr.bf16.mxu0 %v2103
        %2303 = vmatpush1.bf16.msra.mxu0 %v2102
        %2304 = vmatprep.subr.bf16.mxu0 %v2111
        %2305 = vmatpush1.bf16.msra.mxu0 %v2110
        %2306 = vmatprep.subr.bf16.mxu0 %v2119
        %2307 = vmatpush1.bf16.msra.mxu0 %v2118
        %2308 = vmatprep.subr.bf16.mxu0 %v2127
        %2309 = vmatpush1.bf16.msra.mxu0 %v2126
        %2310 = vmatprep.subr.bf16.mxu0 %v2135
        %2311 = vmatpush1.bf16.msra.mxu0 %v2134
        %2312 = vmatprep.subr.bf16.mxu0 %v2143
        %2313 = vmatpush1.bf16.msra.mxu0 %v2142
        %2314 = vmatprep.subr.bf16.mxu0 %v2151
        %2315 = vmatpush1.bf16.msra.mxu0 %v2150
        %2316 = vmatprep.subr.bf16.mxu0 0
        %2317 = vmatpush1.bf16.msra.mxu0 0
        %2318 = vmatprep.subr.bf16.mxu0 0
        %2319 = vmatpush1.bf16.msra.mxu0 0
        %2320 = vmatprep.subr.bf16.mxu0 0
        %2321 = vmatpush1.bf16.msra.mxu0 0
        %2322 = vmatprep.subr.bf16.mxu0 0
        %2323 = vmatpush1.bf16.msra.mxu0 0
        %2324 = vmatprep.subr.bf16.mxu0 0
        %2325 = vmatpush1.bf16.msra.mxu0 0
        %2326 = vmatprep.subr.bf16.mxu0 0
        %2327 = vmatpush1.bf16.msra.mxu0 0
        %2328 = vmatprep.subr.bf16.mxu0 0
        %2329 = vmatpush1.bf16.msra.mxu0 0
        %2330 = vmatprep.subr.bf16.mxu0 0
        %2331 = vmatpush1.bf16.msra.mxu0 0
        %2332 = vmatprep.mubr.bf16.mxu0 0
        %2333 = vmatmul.mubr.bf16.gmra.mrb[0].mxu0 %v1791
        %v2334 = vpop.f32.mrb[0].mxu0
        %v2335 = vadd.f32 %v1877, %v2334
        %v2336 = vpop.f32.mrb[0].mxu0
        %v2337 = vadd.f32 %v1881, %v2336
        %v2338 = vpop.f32.mrb[0].mxu0
        %v2339 = vpop.f32.mrb[0].mxu0
        %2340 = vdwg.mxu0
        %2341 = vmatprep.subr.bf16.mxu0 %v2097
        %2342 = vmatpush1.bf16.msra.mxu0 %v2096
        %2343 = vmatprep.subr.bf16.mxu0 %v2105
        %2344 = vmatpush1.bf16.msra.mxu0 %v2104
        %2345 = vmatprep.subr.bf16.mxu0 %v2113
        %2346 = vmatpush1.bf16.msra.mxu0 %v2112
        %2347 = vmatprep.subr.bf16.mxu0 %v2121
        %2348 = vmatpush1.bf16.msra.mxu0 %v2120
        %2349 = vmatprep.subr.bf16.mxu0 %v2129
        %2350 = vmatpush1.bf16.msra.mxu0 %v2128
        %2351 = vmatprep.subr.bf16.mxu0 %v2137
        %2352 = vmatpush1.bf16.msra.mxu0 %v2136
        %2353 = vmatprep.subr.bf16.mxu0 %v2145
        %2354 = vmatpush1.bf16.msra.mxu0 %v2144
        %2355 = vmatprep.subr.bf16.mxu0 %v2153
        %2356 = vmatpush1.bf16.msra.mxu0 %v2152
        %2357 = vmatprep.subr.bf16.mxu0 0
        %2358 = vmatpush1.bf16.msra.mxu0 0
        %2359 = vmatprep.subr.bf16.mxu0 0
        %2360 = vmatpush1.bf16.msra.mxu0 0
        %2361 = vmatprep.subr.bf16.mxu0 0
        %2362 = vmatpush1.bf16.msra.mxu0 0
        %2363 = vmatprep.subr.bf16.mxu0 0
        %2364 = vmatpush1.bf16.msra.mxu0 0
        %2365 = vmatprep.subr.bf16.mxu0 0
        %2366 = vmatpush1.bf16.msra.mxu0 0
        %2367 = vmatprep.subr.bf16.mxu0 0
        %2368 = vmatpush1.bf16.msra.mxu0 0
        %2369 = vmatprep.subr.bf16.mxu0 0
        %2370 = vmatpush1.bf16.msra.mxu0 0
        %2371 = vmatprep.subr.bf16.mxu0 0
        %2372 = vmatpush1.bf16.msra.mxu0 0
        %2373 = vmatprep.mubr.bf16.mxu0 0
        %2374 = vmatmul.mubr.bf16.gmra.mrb[0].mxu0 %v1791
        %v2375 = vpop.f32.mrb[0].mxu0
        %v2376 = vadd.f32 %v1885, %v2375
        %v2377 = vpop.f32.mrb[0].mxu0
        %v2378 = vadd.f32 %v1889, %v2377
        %v2379 = vpop.f32.mrb[0].mxu0
        %v2380 = vpop.f32.mrb[0].mxu0
        %2381 = vdwg.mxu0
        %v2382 = vmul.f32 %v2335, %v2335
        %v2383 = vmul.f32 %v2337, %v2337
        %v2384 = vmul.f32 %v2376, %v2376
        %v2385 = vmul.f32 %v2378, %v2378
        %v2386 = vmul.f32 %v2335, %v2382
        %v2387 = vmul.f32 %v2337, %v2383
        %v2388 = vmul.f32 %v2376, %v2384
        %v2389 = vmul.f32 %v2378, %v2385
        %v2390 = vmul.f32 %v2386, 0.044715
        %v2391 = vmul.f32 %v2387, 0.044715
        %v2392 = vmul.f32 %v2388, 0.044715
        %v2393 = vmul.f32 %v2389, 0.044715
        %v2394 = vadd.f32 %v2335, %v2390
        %v2395 = vadd.f32 %v2337, %v2391
        %v2396 = vadd.f32 %v2376, %v2392
        %v2397 = vadd.f32 %v2378, %v2393
        %v2398 = vmul.f32 %v2394, 0.7978846
        %v2399 = vmul.f32 %v2395, 0.7978846
        %v2400 = vmul.f32 %v2396, 0.7978846
        %v2401 = vmul.f32 %v2397, 0.7978846
        %v2402 = vtanh.pop %v2398
        %v2403 = vtanh.pop %v2399
        %v2404 = vtanh.pop %v2400
        %v2405 = vtanh.pop %v2401
        %v2406 = vadd.f32 %v2402, 1.0
        %v2407 = vadd.f32 %v2403, 1.0
        %v2408 = vadd.f32 %v2404, 1.0
        %v2409 = vadd.f32 %v2405, 1.0
        %v2410 = vmul.f32 %v2406, 0.5
        %v2411 = vmul.f32 %v2407, 0.5
        %v2412 = vmul.f32 %v2408, 0.5
        %v2413 = vmul.f32 %v2409, 0.5
        %v2414 = vmul.f32 %v2335, %v2410
        %v2415 = vmul.f32 %v2337, %v2411
        %v2416 = vmul.f32 %v2376, %v2412
        %v2417 = vmul.f32 %v2378, %v2413
        %v2418 = vmul.f32 %v2253, %v2414
        %v2419 = vmul.f32 %v2255, %v2415
        %v2420 = vmul.f32 %v2294, %v2416
        %v2421 = vmul.f32 %v2296, %v2417
        %v2422 = vpack.c.bf16 %v2418, %v2418
        %v2423 = vpack.c.bf16 %v2419, %v2419
        %v2424 = vpack.c.bf16 %v2420, %v2420
        %v2425 = vpack.c.bf16 %v2421, %v2421
        %v2426 = vld [vmem:[%s594] sm:$0xf]
        %v2427 = vld [vmem:[%s594 + $0x4] sm:$0xf]
        %v2428 = vld [vmem:[%s594 + $0x8] sm:$0xf]
        %v2429 = vld [vmem:[%s594 + $0xc] sm:$0xf]
        %v2430 = vld [vmem:[%s594 + $0x10] sm:$0xf]
        %v2431 = vld [vmem:[%s594 + $0x14] sm:$0xf]
        %v2432 = vld [vmem:[%s594 + $0x18] sm:$0xf]
        %v2433 = vld [vmem:[%s594 + $0x1c] sm:$0xf]
        %v2434 = vld [vmem:[%s594 + $0x20] sm:$0xf]
        %v2435 = vld [vmem:[%s594 + $0x24] sm:$0xf]
        %v2436 = vld [vmem:[%s594 + $0x28] sm:$0xf]
        %v2437 = vld [vmem:[%s594 + $0x2c] sm:$0xf]
        %v2438 = vld [vmem:[%s594 + $0x30] sm:$0xf]
        %v2439 = vld [vmem:[%s594 + $0x34] sm:$0xf]
        %v2440 = vld [vmem:[%s594 + $0x38] sm:$0xf]
        %v2441 = vld [vmem:[%s594 + $0x3c] sm:$0xf]
        %v2442 = vld [vmem:[%s594 + $0x40] sm:$0xf]
        %v2443 = vld [vmem:[%s594 + $0x44] sm:$0xf]
        %v2444 = vld [vmem:[%s594 + $0x48] sm:$0xf]
        %v2445 = vld [vmem:[%s594 + $0x4c] sm:$0xf]
        %v2446 = vld [vmem:[%s594 + $0x50] sm:$0xf]
        %v2447 = vld [vmem:[%s594 + $0x54] sm:$0xf]
        %v2448 = vld [vmem:[%s594 + $0x58] sm:$0xf]
        %v2449 = vld [vmem:[%s594 + $0x5c] sm:$0xf]
        %v2450 = vld [vmem:[%s594 + $0x60] sm:$0xf]
        %v2451 = vld [vmem:[%s594 + $0x64] sm:$0xf]
        %v2452 = vld [vmem:[%s594 + $0x68] sm:$0xf]
        %v2453 = vld [vmem:[%s594 + $0x6c] sm:$0xf]
        %v2454 = vld [vmem:[%s594 + $0x70] sm:$0xf]
        %v2455 = vld [vmem:[%s594 + $0x74] sm:$0xf]
        %v2456 = vld [vmem:[%s594 + $0x78] sm:$0xf]
        %v2457 = vld [vmem:[%s594 + $0x7c] sm:$0xf]
        %v2458 = vld [vmem:[%s594 + $0x80] sm:$0xf]
        %v2459 = vld [vmem:[%s594 + $0x84] sm:$0xf]
        %v2460 = vld [vmem:[%s594 + $0x88] sm:$0xf]
        %v2461 = vld [vmem:[%s594 + $0x8c] sm:$0xf]
        %v2462 = vld [vmem:[%s594 + $0x90] sm:$0xf]
        %v2463 = vld [vmem:[%s594 + $0x94] sm:$0xf]
        %v2464 = vld [vmem:[%s594 + $0x98] sm:$0xf]
        %v2465 = vld [vmem:[%s594 + $0x9c] sm:$0xf]
        %v2466 = vld [vmem:[%s594 + $0xa0] sm:$0xf]
        %v2467 = vld [vmem:[%s594 + $0xa4] sm:$0xf]
        %v2468 = vld [vmem:[%s594 + $0xa8] sm:$0xf]
        %v2469 = vld [vmem:[%s594 + $0xac] sm:$0xf]
        %v2470 = vld [vmem:[%s594 + $0xb0] sm:$0xf]
        %v2471 = vld [vmem:[%s594 + $0xb4] sm:$0xf]
        %v2472 = vld [vmem:[%s594 + $0xb8] sm:$0xf]
        %v2473 = vld [vmem:[%s594 + $0xbc] sm:$0xf]
        %v2474 = vld [vmem:[%s594 + $0xc0] sm:$0xf]
        %v2475 = vld [vmem:[%s594 + $0xc4] sm:$0xf]
        %v2476 = vld [vmem:[%s594 + $0xc8] sm:$0xf]
        %v2477 = vld [vmem:[%s594 + $0xcc] sm:$0xf]
        %v2478 = vld [vmem:[%s594 + $0xd0] sm:$0xf]
        %v2479 = vld [vmem:[%s594 + $0xd4] sm:$0xf]
        %v2480 = vld [vmem:[%s594 + $0xd8] sm:$0xf]
        %v2481 = vld [vmem:[%s594 + $0xdc] sm:$0xf]
        %v2482 = vld [vmem:[%s594 + $0xe0] sm:$0xf]
        %v2483 = vld [vmem:[%s594 + $0xe4] sm:$0xf]
        %v2484 = vld [vmem:[%s594 + $0xe8] sm:$0xf]
        %v2485 = vld [vmem:[%s594 + $0xec] sm:$0xf]
        %v2486 = vld [vmem:[%s594 + $0xf0] sm:$0xf]
        %v2487 = vld [vmem:[%s594 + $0xf4] sm:$0xf]
        %v2488 = vld [vmem:[%s594 + $0xf8] sm:$0xf]
        %v2489 = vld [vmem:[%s594 + $0xfc] sm:$0xf]
        %v2490 = vld [vmem:[%s684] sm:$0x1]
        %v2492 = vlaneseq
        %v2493 = vshrl.u32 %v2492, 7
        %v2494 = vsub.s32 0, %v2493
        %v2495 = vrot.slane %v2490, %v2494
        %v2561 = vunpack.c.l.b16 %v2426
        %v2562 = vunpack.c.l.b16 %v2427
        %v2563 = vunpack.c.l.b16 %v2428
        %v2564 = vunpack.c.l.b16 %v2429
        %v2565 = vunpack.c.l.b16 %v2430
        %v2566 = vunpack.c.l.b16 %v2431
        %v2567 = vunpack.c.l.b16 %v2432
        %v2568 = vunpack.c.l.b16 %v2433
        %v2569 = vunpack.c.l.b16 %v2434
        %v2570 = vunpack.c.l.b16 %v2435
        %v2571 = vunpack.c.l.b16 %v2436
        %v2572 = vunpack.c.l.b16 %v2437
        %v2573 = vunpack.c.l.b16 %v2438
        %v2574 = vunpack.c.l.b16 %v2439
        %v2575 = vunpack.c.l.b16 %v2440
        %v2576 = vunpack.c.l.b16 %v2441
        %v2577 = vunpack.c.l.b16 %v2442
        %v2578 = vunpack.c.l.b16 %v2443
        %v2579 = vunpack.c.l.b16 %v2444
        %v2580 = vunpack.c.l.b16 %v2445
        %v2581 = vunpack.c.l.b16 %v2446
        %v2582 = vunpack.c.l.b16 %v2447
        %v2583 = vunpack.c.l.b16 %v2448
        %v2584 = vunpack.c.l.b16 %v2449
        %v2585 = vunpack.c.l.b16 %v2450
        %v2586 = vunpack.c.l.b16 %v2451
        %v2587 = vunpack.c.l.b16 %v2452
        %v2588 = vunpack.c.l.b16 %v2453
        %v2589 = vunpack.c.l.b16 %v2454
        %v2590 = vunpack.c.l.b16 %v2455
        %v2591 = vunpack.c.l.b16 %v2456
        %v2592 = vunpack.c.l.b16 %v2457
        %v2593 = vunpack.c.l.b16 %v2458
        %v2594 = vunpack.c.l.b16 %v2459
        %v2595 = vunpack.c.l.b16 %v2460
        %v2596 = vunpack.c.l.b16 %v2461
        %v2597 = vunpack.c.l.b16 %v2462
        %v2598 = vunpack.c.l.b16 %v2463
        %v2599 = vunpack.c.l.b16 %v2464
        %v2600 = vunpack.c.l.b16 %v2465
        %v2601 = vunpack.c.l.b16 %v2466
        %v2602 = vunpack.c.l.b16 %v2467
        %v2603 = vunpack.c.l.b16 %v2468
        %v2604 = vunpack.c.l.b16 %v2469
        %v2605 = vunpack.c.l.b16 %v2470
        %v2606 = vunpack.c.l.b16 %v2471
        %v2607 = vunpack.c.l.b16 %v2472
        %v2608 = vunpack.c.l.b16 %v2473
        %v2609 = vunpack.c.l.b16 %v2474
        %v2610 = vunpack.c.l.b16 %v2475
        %v2611 = vunpack.c.l.b16 %v2476
        %v2612 = vunpack.c.l.b16 %v2477
        %v2613 = vunpack.c.l.b16 %v2478
        %v2614 = vunpack.c.l.b16 %v2479
        %v2615 = vunpack.c.l.b16 %v2480
        %v2616 = vunpack.c.l.b16 %v2481
        %v2617 = vunpack.c.l.b16 %v2482
        %v2618 = vunpack.c.l.b16 %v2483
        %v2619 = vunpack.c.l.b16 %v2484
        %v2620 = vunpack.c.l.b16 %v2485
        %v2621 = vunpack.c.l.b16 %v2486
        %v2622 = vunpack.c.l.b16 %v2487
        %v2623 = vunpack.c.l.b16 %v2488
        %v2624 = vunpack.c.l.b16 %v2489
        %v2625 = vpack.c.b16 %v2562, %v2561
        %v2626 = vpack.c.b16 %v2564, %v2563
        %v2627 = vpack.c.b16 %v2566, %v2565
        %v2628 = vpack.c.b16 %v2568, %v2567
        %v2629 = vpack.c.b16 %v2570, %v2569
        %v2630 = vpack.c.b16 %v2572, %v2571
        %v2631 = vpack.c.b16 %v2574, %v2573
        %v2632 = vpack.c.b16 %v2576, %v2575
        %v2633 = vpack.c.b16 %v2578, %v2577
        %v2634 = vpack.c.b16 %v2580, %v2579
        %v2635 = vpack.c.b16 %v2582, %v2581
        %v2636 = vpack.c.b16 %v2584, %v2583
        %v2637 = vpack.c.b16 %v2586, %v2585
        %v2638 = vpack.c.b16 %v2588, %v2587
        %v2639 = vpack.c.b16 %v2590, %v2589
        %v2640 = vpack.c.b16 %v2592, %v2591
        %v2641 = vpack.c.b16 %v2594, %v2593
        %v2642 = vpack.c.b16 %v2596, %v2595
        %v2643 = vpack.c.b16 %v2598, %v2597
        %v2644 = vpack.c.b16 %v2600, %v2599
        %v2645 = vpack.c.b16 %v2602, %v2601
        %v2646 = vpack.c.b16 %v2604, %v2603
        %v2647 = vpack.c.b16 %v2606, %v2605
        %v2648 = vpack.c.b16 %v2608, %v2607
        %v2649 = vpack.c.b16 %v2610, %v2609
        %v2650 = vpack.c.b16 %v2612, %v2611
        %v2651 = vpack.c.b16 %v2614, %v2613
        %v2652 = vpack.c.b16 %v2616, %v2615
        %v2653 = vpack.c.b16 %v2618, %v2617
        %v2654 = vpack.c.b16 %v2620, %v2619
        %v2655 = vpack.c.b16 %v2622, %v2621
        %v2656 = vpack.c.b16 %v2624, %v2623
        %2689 = vmatprep.subr.bf16.mxu0 0
        %2690 = vmatpush1.bf16.msra.mxu0 %v2625
        %2691 = vmatprep.subr.bf16.mxu0 0
        %2692 = vmatpush1.bf16.msra.mxu0 %v2626
        %2693 = vmatprep.subr.bf16.mxu0 0
        %2694 = vmatpush1.bf16.msra.mxu0 %v2627
        %2695 = vmatprep.subr.bf16.mxu0 0
        %2696 = vmatpush1.bf16.msra.mxu0 %v2628
        %2697 = vmatprep.subr.bf16.mxu0 0
        %2698 = vmatpush1.bf16.msra.mxu0 %v2629
        %2699 = vmatprep.subr.bf16.mxu0 0
        %2700 = vmatpush1.bf16.msra.mxu0 %v2630
        %2701 = vmatprep.subr.bf16.mxu0 0
        %2702 = vmatpush1.bf16.msra.mxu0 %v2631
        %2703 = vmatprep.subr.bf16.mxu0 0
        %2704 = vmatpush1.bf16.msra.mxu0 %v2632
        %2705 = vmatprep.subr.bf16.mxu0 0
        %2706 = vmatpush1.bf16.msra.mxu0 %v2633
        %2707 = vmatprep.subr.bf16.mxu0 0
        %2708 = vmatpush1.bf16.msra.mxu0 %v2634
        %2709 = vmatprep.subr.bf16.mxu0 0
        %2710 = vmatpush1.bf16.msra.mxu0 %v2635
        %2711 = vmatprep.subr.bf16.mxu0 0
        %2712 = vmatpush1.bf16.msra.mxu0 %v2636
        %2713 = vmatprep.subr.bf16.mxu0 0
        %2714 = vmatpush1.bf16.msra.mxu0 %v2637
        %2715 = vmatprep.subr.bf16.mxu0 0
        %2716 = vmatpush1.bf16.msra.mxu0 %v2638
        %2717 = vmatprep.subr.bf16.mxu0 0
        %2718 = vmatpush1.bf16.msra.mxu0 %v2639
        %2719 = vmatprep.subr.bf16.mxu0 0
        %2720 = vmatpush1.bf16.msra.mxu0 %v2640
        %2721 = vmatprep.mubr.bf16.mxu0 %v2423
        %2722 = vmatmul.mubr.bf16.gmra.mrb[0].mxu0 %v2422
        %v2723 = vpop.f32.mrb[0].mxu0
        %v2724 = vadd.f32 %v2495, %v2723
        %v2725 = vpop.f32.mrb[0].mxu0
        %v2726 = vpop.f32.mrb[0].mxu0
        %v2727 = vpop.f32.mrb[0].mxu0
        %2728 = vdwg.mxu0
        %2729 = vmatprep.subr.bf16.mxu0 0
        %2730 = vmatpush1.bf16.msra.mxu0 %v2641
        %2731 = vmatprep.subr.bf16.mxu0 0
        %2732 = vmatpush1.bf16.msra.mxu0 %v2642
        %2733 = vmatprep.subr.bf16.mxu0 0
        %2734 = vmatpush1.bf16.msra.mxu0 %v2643
        %2735 = vmatprep.subr.bf16.mxu0 0
        %2736 = vmatpush1.bf16.msra.mxu0 %v2644
        %2737 = vmatprep.subr.bf16.mxu0 0
        %2738 = vmatpush1.bf16.msra.mxu0 %v2645
        %2739 = vmatprep.subr.bf16.mxu0 0
        %2740 = vmatpush1.bf16.msra.mxu0 %v2646
        %2741 = vmatprep.subr.bf16.mxu0 0
        %2742 = vmatpush1.bf16.msra.mxu0 %v2647
        %2743 = vmatprep.subr.bf16.mxu0 0
        %2744 = vmatpush1.bf16.msra.mxu0 %v2648
        %2745 = vmatprep.subr.bf16.mxu0 0
        %2746 = vmatpush1.bf16.msra.mxu0 %v2649
        %2747 = vmatprep.subr.bf16.mxu0 0
        %2748 = vmatpush1.bf16.msra.mxu0 %v2650
        %2749 = vmatprep.subr.bf16.mxu0 0
        %2750 = vmatpush1.bf16.msra.mxu0 %v2651
        %2751 = vmatprep.subr.bf16.mxu0 0
        %2752 = vmatpush1.bf16.msra.mxu0 %v2652
        %2753 = vmatprep.subr.bf16.mxu0 0
        %2754 = vmatpush1.bf16.msra.mxu0 %v2653
        %2755 = vmatprep.subr.bf16.mxu0 0
        %2756 = vmatpush1.bf16.msra.mxu0 %v2654
        %2757 = vmatprep.subr.bf16.mxu0 0
        %2758 = vmatpush1.bf16.msra.mxu0 %v2655
        %2759 = vmatprep.subr.bf16.mxu0 0
        %2760 = vmatpush1.bf16.msra.mxu0 %v2656
        %2761 = vmatprep.mubr.bf16.mxu0 %v2425
        %2762 = vmatmul.mubr.bf16.gmra.mrb[0].mxu0 %v2424
        %v2763 = vpop.f32.mrb[0].mxu0
        %v2764 = vadd.f32 %v2724, %v2763
        %v2765 = vpop.f32.mrb[0].mxu0
        %v2766 = vpop.f32.mrb[0].mxu0
        %v2767 = vpop.f32.mrb[0].mxu0
        %2768 = vdwg.mxu0
        %v2769 = vadd.f32 %v2764, %v1790
        %2770 = vst [vmem:[#allocation2] sm:$0xff] %v2769
        %p2771 = scmp.eq.s32.totalorder %s34, 2
        // Predicated region
        $region101: #{tpu_custom_call.1} parent=67 // pred_check
          %p2772 = pneg %p2771
        $region102: #{tpu_custom_call.1} parent=67 // pred_check_branch
          %2774 = sbr.rel (%p2772) target = $region104
        $region103: #{tpu_custom_call.1} parent=67 // pred_region
          %2775 = vst [vmem:[#allocation15] sm:$0xff] %v2769
        $region104: #{tpu_custom_call.1} parent=67 // pred_fallthru
          _
        // Predicated region
        $region105: #{tpu_custom_call.1} parent=67 // pred_check
          %p2776 = pneg %p354
        $region106: #{tpu_custom_call.1} parent=67 // pred_check_branch
          %2778 = sbr.rel (%p2776) target = $region108
        $region107: #{tpu_custom_call.1} parent=67 // pred_region
          %s2780 = ssub.s32 128, 128
          %2781 = vsyncadd [#allocation5], %s2780
          %s2783 = sshll.u32 [#allocation15], 4
          %s2784 = int_to_ptr.vmem [resolvable:$true] %s2783
          %2786 = dma.vmem_to_hbm [thread:$0]  %s2784, 128, %s12, [#allocation5]
        $region108: #{tpu_custom_call.1} parent=67 // pred_fallthru
          _
        // Predicated region
        $region109: #{tpu_custom_call.1} parent=67 // pred_check
          %p2787 = pneg %p354
        $region110: #{tpu_custom_call.1} parent=67 // pred_check_branch
          %2789 = sbr.rel (%p2787) target = $region112
        $region111: #{tpu_custom_call.1} parent=67 // pred_region
          %2790 = dma.done [#allocation5], 128
        $region112: #{tpu_custom_call.1} parent=67 // pred_fallthru
          _
      $region68: #{tpu_custom_call.1} parent=5 // pred_fallthru
        _
      %p2791 = scmp.le.s32.totalorder 2, %s29
      // Predicated region
      $region113: #{tpu_custom_call.1} parent=5 // pred_check
        %p2792 = pneg %p2791
      $region114: #{tpu_custom_call.1} parent=5 // pred_check_branch
        %2794 = sbr.rel (%p2792) target = $region116
      $region115: #{tpu_custom_call.1} parent=5 // pred_region
        %s2795 = ssub.s32 %s29, 2
      $region116: #{tpu_custom_call.1} parent=5 // pred_fallthru
        _
    $region6: #{tpu_custom_call.1} parent=1 // loop_footer
      %s33 = sadd.s32 1, %s29
    $region7: #{tpu_custom_call.1} parent=1 // loop_footer_branch
      %28 = sbr.rel target = $region3
    $region8: #{tpu_custom_call.1} parent=1 // loop_exit
      _
    %2796 = vsyncpa [#allocation4], 1
    %s2797 = scalar_lea.sflag [#allocation4], 1
    %2798 = vsyncpa %s2797, 1
    %2799 = vsyncpa [#allocation7], 1
    %s2800 = scalar_lea.sflag [#allocation7], 1
    %2801 = vsyncpa %s2800, 1
    %2802 = vsyncpa [#allocation10], 1
    %s2803 = scalar_lea.sflag [#allocation10], 1
    %2804 = vsyncpa %s2803, 1
    %2805 = vsyncpa [#allocation13], 1
    %s2806 = scalar_lea.sflag [#allocation13], 1
    %2807 = vsyncpa %s2806, 1
    %2808 = vsyncpa [#allocation5], 1
    %s2809 = scalar_lea.sflag [#allocation5], 1
    %2810 = vsyncpa %s2809, 1

</llo_original>
